<compile_context>
chip_gen: v6e
topology: v6e:2x2x1
jax: 0.10.0
libtpu: 0.0.40
codegen_flags: <defaults>
</compile_context>

<pallas_src>
import functools

import jax
import jax.numpy as jnp
import numpy as np
from jax import lax
from jax.experimental import pallas as pl
from jax.experimental.pallas import tpu as pltpu


def make_divisible(v, divisor, min_value=None):
    if min_value is None:
        min_value = divisor
    new_v = max(min_value, int(v + divisor / 2) // divisor * divisor)
    if new_v < 0.9 * v:
        new_v += divisor
    return new_v


def _silu(x):
    return x * jax.nn.sigmoid(x)


# ============================  Fused kernel  ============================

def _mbconv_kernel(x_ref, we_ref, se_ref, be_ref,
                   wd_ref, sd_ref, bd_ref,
                   w1_ref, b1_ref, w2_ref, b2_ref,
                   wp_ref, sp_ref, bp_ref,
                   o_ref, buf_ref, *,
                   H, W, K, pad, PADL, has_expand, use_res):
    HW = H * W
    x = x_ref[0]                                            # (Cin, HW) f32

    # ---- 1x1 expand conv + folded BN + SiLU (channel-major, lane-dense) ----
    if has_expand:
        y = jnp.dot(we_ref[...], x, preferred_element_type=jnp.float32)
        y = _silu(y * se_ref[...] + be_ref[...])            # (Cexp, HW)
    else:
        y = x
    Cexp = y.shape[0]

    # ---- depthwise KxK (stride 1, 'same' padding), folded BN + SiLU ----
    # Zero-margined flat buffer: out-of-image rows read physical zeros; the
    # row wrap-around in the W direction is killed by per-kw lane masks.
    buf_ref[...] = jnp.zeros_like(buf_ref)
    buf_ref[:, PADL:PADL + HW] = y                          # aligned, lane-dense

    col = lax.broadcasted_iota(jnp.int32, (1, HW), 1) % W   # output w coordinate
    col_masks = []
    for kw in range(K):                                     # hoisted out of taps
        dwo = kw - pad
        if dwo == 0:
            col_masks.append(None)
        else:
            valid = jnp.logical_and(col + dwo >= 0, col + dwo < W)
            col_masks.append(valid.astype(jnp.float32))     # (1, HW)

    acc = jnp.zeros((Cexp, HW), jnp.float32)
    for kh in range(K):
        for kw in range(K):
            off = PADL + (kh - pad) * W + (kw - pad)
            tap = buf_ref[:, off:off + HW]                  # (Cexp, HW)
            wk = wd_ref[:, kh * K + kw:kh * K + kw + 1]     # (Cexp, 1)
            term = tap * wk
            if col_masks[kw] is not None:
                term = term * col_masks[kw]
            acc = acc + term
    dwa = _silu(acc * sd_ref[...] + bd_ref[...])            # (Cexp, HW)

    # ---- SqueezeExcitation (tiny FCs on the VPU, channel-on-sublane) ----
    pooled = jnp.mean(dwa, axis=1, keepdims=True)           # (Cexp, 1)
    z = jnp.sum(w1_ref[...] * pooled, axis=0, keepdims=True) + b1_ref[...]
    z = _silu(z)                                            # (1, Csq)
    Csq = w2_ref.shape[1]
    gate = b2_ref[...]                                      # (Cexp, 1)
    for s in range(Csq):
        gate = gate + w2_ref[:, s:s + 1] * z[:, s:s + 1]
    gate = jax.nn.sigmoid(gate)                             # (Cexp, 1)
    xs = dwa * gate                                         # (Cexp, HW)

    # ---- 1x1 projection + folded BN (+ residual; StochasticDepth = id) ----
    out = jnp.dot(wp_ref[...], xs, preferred_element_type=jnp.float32)
    out = out * sp_ref[...] + bp_ref[...]                   # (Cout, HW)
    if use_res:
        out = out + x
    o_ref[0] = out                                          # lane-dense store


# ============================  Wrapper  ============================

def mbconv_pallas(x_nchw, p, cfg):
    N, Cin, H, W = x_nchw.shape
    K, stride, pad = cfg["kernel"], cfg["stride"], cfg["padding"]
    Cexp, Cout, Csq = cfg["Cexp"], cfg["Cout"], cfg["Csq"]
    use_res = cfg["use_res_connect"]
    has_expand = Cexp != Cin
    HW = H * W

    # TODO(synk): general stride / non-'same' padding needs a row-strip layout
    # (output flat index != input flat index); standard MBConv residual blocks
    # (K=3 pad=1 / K=5 pad=2, stride 1) are handled here.
    assert stride == 1 and 2 * pad == K - 1
    if use_res:
        assert Cin == Cout

    f32 = jnp.float32
    x = x_nchw.reshape(N, Cin, HW).astype(f32)              # free reshape, stays NCHW

    if has_expand:
        we = p["w_exp"].T.astype(f32)                       # (Cexp, Cin)
        se = p["s_exp"].reshape(Cexp, 1).astype(f32)
        be = p["b_exp"].reshape(Cexp, 1).astype(f32)
    else:
        we = jnp.zeros((1, 1), f32)                         # unused placeholders
        se = jnp.zeros((1, 1), f32)
        be = jnp.zeros((1, 1), f32)
    wd = p["w_dw"].reshape(K * K, Cexp).T.astype(f32)       # (Cexp, K*K)
    sd = p["s_dw"].reshape(Cexp, 1).astype(f32)
    bd = p["b_dw"].reshape(Cexp, 1).astype(f32)
    w1 = p["w_se1"].astype(f32)                             # (Cexp, Csq)
    b1 = p["b_se1"].reshape(1, Csq).astype(f32)
    w2 = p["w_se2"].T.astype(f32)                           # (Cexp, Csq)
    b2 = p["b_se2"].reshape(Cexp, 1).astype(f32)
    wp = p["w_proj"].T.astype(f32)                          # (Cout, Cexp)
    sp = p["s_proj"].reshape(Cout, 1).astype(f32)
    bp = p["b_proj"].reshape(Cout, 1).astype(f32)

    margin = pad * W + pad                                  # lane margin needed
    PADL = ((margin + 127) // 128) * 128 if margin else 0   # keep interior aligned

    def full2d(a):
        return pl.BlockSpec(a.shape, lambda n: (0, 0))

    out = pl.pallas_call(
        functools.partial(_mbconv_kernel, H=H, W=W, K=K, pad=pad, PADL=PADL,
                          has_expand=has_expand, use_res=use_res),
        out_shape=jax.ShapeDtypeStruct((N, Cout, HW), f32),
        grid_spec=pltpu.PrefetchScalarGridSpec(
            num_scalar_prefetch=0,
            grid=(N,),
            in_specs=[pl.BlockSpec((1, Cin, HW), lambda n: (n, 0, 0)),
                      full2d(we), full2d(se), full2d(be),
                      full2d(wd), full2d(sd), full2d(bd),
                      full2d(w1), full2d(b1), full2d(w2), full2d(b2),
                      full2d(wp), full2d(sp), full2d(bp)],
            out_specs=pl.BlockSpec((1, Cout, HW), lambda n: (n, 0, 0)),
            scratch_shapes=[pltpu.VMEM((Cexp, PADL + HW + PADL), f32)],
        ),
        compiler_params=pltpu.CompilerParams(
            dimension_semantics=("parallel",)),
    )(x, we, se, be, wd, sd, bd, w1, b1, w2, b2, wp, sp, bp)

    return out.reshape(N, Cout, H, W)                       # free reshape (NCHW)


# ============================  Params & reference  ============================

def init_params(key, Cin, Cexp, Cout, K, Csq, eps=1e-3):
    ks = jax.random.split(key, 10)

    def u(k, shape, lo, hi):
        return jax.random.uniform(k, shape, jnp.float32, lo, hi)

    def bn_fold(k, C):
        k1, k2, k3, k4 = jax.random.split(k, 4)
        gamma = u(k1, (C,), 0.8, 1.2)
        beta = u(k2, (C,), -0.1, 0.1)
        rmean = u(k3, (C,), -0.1, 0.1)
        rvar = u(k4, (C,), 0.9, 1.1)
        scale = gamma / jnp.sqrt(rvar + eps)
        bias = beta - rmean * scale
        return scale, bias

    w_exp = u(ks[0], (Cin, Cexp), -0.3, 0.3)
    s_exp, b_exp = bn_fold(ks[1], Cexp)
    w_dw = u(ks[2], (K, K, Cexp), -0.3, 0.3)
    s_dw, b_dw = bn_fold(ks[3], Cexp)
    w_se1 = u(ks[4], (Cexp, Csq), -0.3, 0.3)
    b_se1 = u(ks[5], (Csq,), -0.1, 0.1)
    w_se2 = u(ks[6], (Csq, Cexp), -0.3, 0.3)
    b_se2 = u(ks[7], (Cexp,), -0.1, 0.1)
    w_proj = u(ks[8], (Cexp, Cout), -0.3, 0.3)
    s_proj, b_proj = bn_fold(ks[9], Cout)
    return dict(w_exp=w_exp, s_exp=s_exp, b_exp=b_exp,
                w_dw=w_dw, s_dw=s_dw, b_dw=b_dw,
                w_se1=w_se1, b_se1=b_se1, w_se2=w_se2, b_se2=b_se2,
                w_proj=w_proj, s_proj=s_proj, b_proj=b_proj)


def mbconv_reference(x_nchw, p, cfg):
    Cin, Cexp = cfg["Cin"], cfg["Cexp"]
    K, stride, pad = cfg["kernel"], cfg["stride"], cfg["padding"]
    hp = lax.Precision.HIGHEST
    x = jnp.transpose(x_nchw, (0, 2, 3, 1)).astype(jnp.float32)
    y = x
    if Cexp != Cin:
        y = jnp.einsum("nhwc,cd->nhwd", x, p["w_exp"], precision=hp)
        y = _silu(y * p["s_exp"] + p["b_exp"])
    rhs = p["w_dw"][:, :, None, :]                          # (K, K, 1, Cexp)
    y = lax.conv_general_dilated(y, rhs, (stride, stride),
                                 [(pad, pad), (pad, pad)],
                                 dimension_numbers=("NHWC", "HWIO", "NHWC"),
                                 feature_group_count=Cexp, precision=hp)
    y = _silu(y * p["s_dw"] + p["b_dw"])
    pooled = jnp.mean(y, axis=(1, 2))
    z = _silu(pooled @ p["w_se1"] + p["b_se1"])
    gate = jax.nn.sigmoid(z @ p["w_se2"] + p["b_se2"])
    y = y * gate[:, None, None, :]
    y = jnp.einsum("nhwc,cd->nhwd", y, p["w_proj"], precision=hp)
    y = y * p["s_proj"] + p["b_proj"]
    if cfg["use_res_connect"]:
        y = y + x
    return jnp.transpose(y, (0, 3, 1, 2))


if __name__ == "__main__":
    # MBConv(in_channels=8, out_channels=8, kernel=3, stride=1, padding=1,
    #        expand_ratio=4.0, width_mult=1.0), eval mode.
    in_channels, out_channels = 8, 8
    kernel, stride, padding = 3, 1, 1
    expand_ratio, width_mult = 4.0, 1.0
    use_res_connect = (stride == 1 and in_channels == out_channels)

    Cin = make_divisible(in_channels * width_mult, 8, None)
    Cout = make_divisible(out_channels * width_mult, 8, None)
    Cexp = make_divisible(Cin * expand_ratio, 8, None)
    Csq = max(1, Cin // 4)
    cfg = dict(Cin=Cin, Cexp=Cexp, Cout=Cout, Csq=Csq, kernel=kernel,
               stride=stride, padding=padding, use_res_connect=use_res_connect)

    key = jax.random.PRNGKey(0)
    kx, kp = jax.random.split(key)
    x = jax.random.normal(kx, (2, Cin, 16, 16), jnp.float32)       # NCHW
    params = init_params(kp, Cin, Cexp, Cout, kernel, Csq)

    out = jax.jit(lambda xx: mbconv_pallas(xx, params, cfg))(x)
    out = jax.block_until_ready(out)

    ref = mbconv_reference(x, params, cfg)
    np.testing.assert_allclose(np.asarray(out), np.asarray(ref),
                               rtol=1e-2, atol=1e-2)
    assert out.shape == (2, Cout, 16, 16) and out.dtype == jnp.float32
    print("KERNEL_OK")
</pallas_src>

<mosaic_0001>
module attributes {stable_mosaic.version = 11 : i64} {
  func.func @_mbconv_kernel(%arg0: i32, %arg1: memref<1x8x256xf32, #tpu.memory_space<vmem>>, %arg2: memref<32x8xf32, #tpu.memory_space<vmem>>, %arg3: memref<32x1xf32, #tpu.memory_space<vmem>>, %arg4: memref<32x1xf32, #tpu.memory_space<vmem>>, %arg5: memref<32x9xf32, #tpu.memory_space<vmem>>, %arg6: memref<32x1xf32, #tpu.memory_space<vmem>>, %arg7: memref<32x1xf32, #tpu.memory_space<vmem>>, %arg8: memref<32x2xf32, #tpu.memory_space<vmem>>, %arg9: memref<1x2xf32, #tpu.memory_space<vmem>>, %arg10: memref<32x2xf32, #tpu.memory_space<vmem>>, %arg11: memref<32x1xf32, #tpu.memory_space<vmem>>, %arg12: memref<8x32xf32, #tpu.memory_space<vmem>>, %arg13: memref<8x1xf32, #tpu.memory_space<vmem>>, %arg14: memref<8x1xf32, #tpu.memory_space<vmem>>, %arg15: memref<1x8x256xf32, #tpu.memory_space<vmem>>, %arg16: memref<32x512xf32, #tpu.memory_space<vmem>>) attributes {dimension_semantics = [#tpu.dimension_semantics<parallel>], iteration_bounds = array<i64: 2>, scalar_prefetch = 0 : i64, scratch_operands = 1 : i64, tpu.core_type = #tpu.core_type<tc>, window_params = [{transform_indices = @transform_0, window_bounds = array<i64: 1, 8, 256>}, {pipeline_mode = #tpu.pipeline_mode<synchronous>, transform_indices = @transform_1, window_bounds = array<i64: 32, 8>}, {pipeline_mode = #tpu.pipeline_mode<synchronous>, transform_indices = @transform_2, window_bounds = array<i64: 32, 1>}, {pipeline_mode = #tpu.pipeline_mode<synchronous>, transform_indices = @transform_3, window_bounds = array<i64: 32, 1>}, {pipeline_mode = #tpu.pipeline_mode<synchronous>, transform_indices = @transform_4, window_bounds = array<i64: 32, 9>}, {pipeline_mode = #tpu.pipeline_mode<synchronous>, transform_indices = @transform_5, window_bounds = array<i64: 32, 1>}, {pipeline_mode = #tpu.pipeline_mode<synchronous>, transform_indices = @transform_6, window_bounds = array<i64: 32, 1>}, {pipeline_mode = #tpu.pipeline_mode<synchronous>, transform_indices = @transform_7, window_bounds = array<i64: 32, 2>}, {pipeline_mode = #tpu.pipeline_mode<synchronous>, transform_indices = @transform_8, window_bounds = array<i64: 1, 2>}, {pipeline_mode = #tpu.pipeline_mode<synchronous>, transform_indices = @transform_9, window_bounds = array<i64: 32, 2>}, {pipeline_mode = #tpu.pipeline_mode<synchronous>, transform_indices = @transform_10, window_bounds = array<i64: 32, 1>}, {pipeline_mode = #tpu.pipeline_mode<synchronous>, transform_indices = @transform_11, window_bounds = array<i64: 8, 32>}, {pipeline_mode = #tpu.pipeline_mode<synchronous>, transform_indices = @transform_12, window_bounds = array<i64: 8, 1>}, {pipeline_mode = #tpu.pipeline_mode<synchronous>, transform_indices = @transform_13, window_bounds = array<i64: 8, 1>}, {transform_indices = @transform_14, window_bounds = array<i64: 1, 8, 256>}]} {
    %c0 = arith.constant 0 : index
    %c0_0 = arith.constant 0 : index
    %c0_1 = arith.constant 0 : index
    %0 = vector.load %arg1[%c0, %c0_0, %c0_1] : memref<1x8x256xf32, #tpu.memory_space<vmem>>, vector<1x8x256xf32>
    %1 = vector.shape_cast %0 : vector<1x8x256xf32> to vector<8x256xf32>
    %c0_2 = arith.constant 0 : index
    %c0_3 = arith.constant 0 : index
    %2 = vector.load %arg2[%c0_2, %c0_3] : memref<32x8xf32, #tpu.memory_space<vmem>>, vector<32x8xf32>
    %cst = arith.constant dense<0.000000e+00> : vector<32x256xf32>
    %3 = tpu.matmul %2, %1, %cst {dimension_numbers = #tpu.dot_dimension_numbers<[1], [0], [0], [1], [0, 0, 1, 1], [], []>} : vector<32x8xf32>, vector<8x256xf32>, vector<32x256xf32> -> vector<32x256xf32>
    %c0_4 = arith.constant 0 : index
    %c0_5 = arith.constant 0 : index
    %4 = vector.load %arg3[%c0_4, %c0_5] : memref<32x1xf32, #tpu.memory_space<vmem>>, vector<32x1xf32>
    %5 = vector.broadcast %4 : vector<32x1xf32> to vector<32x256xf32>
    %6 = arith.mulf %3, %5 : vector<32x256xf32>
    %c0_6 = arith.constant 0 : index
    %c0_7 = arith.constant 0 : index
    %7 = vector.load %arg4[%c0_6, %c0_7] : memref<32x1xf32, #tpu.memory_space<vmem>>, vector<32x1xf32>
    %8 = vector.broadcast %7 : vector<32x1xf32> to vector<32x256xf32>
    %9 = arith.addf %6, %8 : vector<32x256xf32>
    %10 = arith.negf %9 : vector<32x256xf32>
    %11 = math.exp %10 : vector<32x256xf32>
    %cst_8 = arith.constant 1.000000e+00 : f32
    %12 = vector.broadcast %cst_8 : f32 to vector<32x256xf32>
    %13 = arith.addf %12, %11 : vector<32x256xf32>
    %14 = arith.divf %12, %13 : vector<32x256xf32>
    %15 = arith.mulf %9, %14 : vector<32x256xf32>
    %cst_9 = arith.constant 0.000000e+00 : f32
    %16 = vector.broadcast %cst_9 : f32 to vector<32x512xf32>
    %c0_10 = arith.constant 0 : index
    %c0_11 = arith.constant 0 : index
    %17 = vector.load %arg16[%c0_10, %c0_11] : memref<32x512xf32, #tpu.memory_space<vmem>>, vector<32x512xf32>
    tpu.vector_store %arg16[%c0_10, %c0_11], %16 {strides = array<i32>} : memref<32x512xf32, #tpu.memory_space<vmem>>, vector<32x512xf32>,
    %c0_12 = arith.constant 0 : index
    %c128 = arith.constant 128 : index
    %18 = vector.load %arg16[%c0_12, %c128] : memref<32x512xf32, #tpu.memory_space<vmem>>, vector<32x256xf32>
    tpu.vector_store %arg16[%c0_12, %c128], %15 {strides = array<i32>} : memref<32x512xf32, #tpu.memory_space<vmem>>, vector<32x256xf32>,
    %19 = tpu.iota {dimensions = array<i32: 1>} : vector<1x256xi32>
    %c16_i32 = arith.constant 16 : i32
    %c0_i32 = arith.constant 0 : i32
    %20 = arith.cmpi eq, %c16_i32, %c0_i32 : i32
    %c1_i32 = arith.constant 1 : i32
    %21 = arith.select %20, %c1_i32, %c16_i32 : i32
    %22 = vector.broadcast %21 : i32 to vector<1x256xi32>
    %23 = arith.remsi %19, %22 : vector<1x256xi32>
    %c0_i32_13 = arith.constant 0 : i32
    %24 = vector.broadcast %c0_i32_13 : i32 to vector<1x256xi32>
    %25 = arith.cmpi ne, %23, %24 : vector<1x256xi32>
    %c0_i32_14 = arith.constant 0 : i32
    %26 = vector.broadcast %c0_i32_14 : i32 to vector<1x256xi32>
    %27 = arith.cmpi slt, %23, %26 : vector<1x256xi32>
    %c0_i32_15 = arith.constant 0 : i32
    %28 = arith.cmpi slt, %21, %c0_i32_15 : i32
    %29 = vector.broadcast %28 : i1 to vector<1x256xi1>
    %30 = vector.broadcast %29 : vector<1x256xi1> to vector<1x256xi1>
    %31 = arith.xori %27, %30 : vector<1x256xi1>
    %32 = arith.andi %31, %25 : vector<1x256xi1>
    %33 = vector.broadcast %21 : i32 to vector<1x256xi32>
    %34 = arith.addi %23, %33 : vector<1x256xi32>
    %35 = arith.select %32, %34, %23 : vector<1x256xi1>, vector<1x256xi32>
    %c-1_i32 = arith.constant -1 : i32
    %36 = vector.broadcast %c-1_i32 : i32 to vector<1x256xi32>
    %37 = arith.addi %35, %36 : vector<1x256xi32>
    %c0_i32_16 = arith.constant 0 : i32
    %38 = vector.broadcast %c0_i32_16 : i32 to vector<1x256xi32>
    %39 = arith.cmpi sge, %37, %38 : vector<1x256xi32>
    %c-1_i32_17 = arith.constant -1 : i32
    %40 = vector.broadcast %c-1_i32_17 : i32 to vector<1x256xi32>
    %41 = arith.addi %35, %40 : vector<1x256xi32>
    %c16_i32_18 = arith.constant 16 : i32
    %42 = vector.broadcast %c16_i32_18 : i32 to vector<1x256xi32>
    %43 = arith.cmpi slt, %41, %42 : vector<1x256xi32>
    %44 = arith.andi %39, %43 : vector<1x256xi1>
    %45 = arith.extui %44 : vector<1x256xi1> to vector<1x256xi32>
    %46 = arith.sitofp %45 : vector<1x256xi32> to vector<1x256xf32>
    %c1_i32_19 = arith.constant 1 : i32
    %47 = vector.broadcast %c1_i32_19 : i32 to vector<1x256xi32>
    %48 = arith.addi %35, %47 : vector<1x256xi32>
    %c0_i32_20 = arith.constant 0 : i32
    %49 = vector.broadcast %c0_i32_20 : i32 to vector<1x256xi32>
    %50 = arith.cmpi sge, %48, %49 : vector<1x256xi32>
    %c1_i32_21 = arith.constant 1 : i32
    %51 = vector.broadcast %c1_i32_21 : i32 to vector<1x256xi32>
    %52 = arith.addi %35, %51 : vector<1x256xi32>
    %c16_i32_22 = arith.constant 16 : i32
    %53 = vector.broadcast %c16_i32_22 : i32 to vector<1x256xi32>
    %54 = arith.cmpi slt, %52, %53 : vector<1x256xi32>
    %55 = arith.andi %50, %54 : vector<1x256xi1>
    %56 = arith.extui %55 : vector<1x256xi1> to vector<1x256xi32>
    %57 = arith.sitofp %56 : vector<1x256xi32> to vector<1x256xf32>
    %cst_23 = arith.constant 0.000000e+00 : f32
    %58 = vector.broadcast %cst_23 : f32 to vector<32x256xf32>
    %c0_24 = arith.constant 0 : index
    %c111 = arith.constant 111 : index
    %59 = vector.load %arg16[%c0_24, %c111] : memref<32x512xf32, #tpu.memory_space<vmem>>, vector<32x256xf32>
    %c0_25 = arith.constant 0 : index
    %c0_26 = arith.constant 0 : index
    %60 = vector.load %arg5[%c0_25, %c0_26] : memref<32x9xf32, #tpu.memory_space<vmem>>, vector<32x1xf32>
    %61 = vector.broadcast %60 : vector<32x1xf32> to vector<32x256xf32>
    %62 = arith.mulf %59, %61 : vector<32x256xf32>
    %63 = vector.broadcast %46 : vector<1x256xf32> to vector<32x256xf32>
    %64 = arith.mulf %62, %63 : vector<32x256xf32>
    %65 = arith.addf %58, %64 : vector<32x256xf32>
    %c0_27 = arith.constant 0 : index
    %c112 = arith.constant 112 : index
    %66 = vector.load %arg16[%c0_27, %c112] : memref<32x512xf32, #tpu.memory_space<vmem>>, vector<32x256xf32>
    %c0_28 = arith.constant 0 : index
    %c1 = arith.constant 1 : index
    %67 = vector.load %arg5[%c0_28, %c1] : memref<32x9xf32, #tpu.memory_space<vmem>>, vector<32x1xf32>
    %68 = vector.broadcast %67 : vector<32x1xf32> to vector<32x256xf32>
    %69 = arith.mulf %66, %68 : vector<32x256xf32>
    %70 = arith.addf %65, %69 : vector<32x256xf32>
    %c0_29 = arith.constant 0 : index
    %c113 = arith.constant 113 : index
    %71 = vector.load %arg16[%c0_29, %c113] : memref<32x512xf32, #tpu.memory_space<vmem>>, vector<32x256xf32>
    %c0_30 = arith.constant 0 : index
    %c2 = arith.constant 2 : index
    %72 = vector.load %arg5[%c0_30, %c2] : memref<32x9xf32, #tpu.memory_space<vmem>>, vector<32x1xf32>
    %73 = vector.broadcast %72 : vector<32x1xf32> to vector<32x256xf32>
    %74 = arith.mulf %71, %73 : vector<32x256xf32>
    %75 = vector.broadcast %57 : vector<1x256xf32> to vector<32x256xf32>
    %76 = arith.mulf %74, %75 : vector<32x256xf32>
    %77 = arith.addf %70, %76 : vector<32x256xf32>
    %c0_31 = arith.constant 0 : index
    %c127 = arith.constant 127 : index
    %78 = vector.load %arg16[%c0_31, %c127] : memref<32x512xf32, #tpu.memory_space<vmem>>, vector<32x256xf32>
    %c0_32 = arith.constant 0 : index
    %c3 = arith.constant 3 : index
    %79 = vector.load %arg5[%c0_32, %c3] : memref<32x9xf32, #tpu.memory_space<vmem>>, vector<32x1xf32>
    %80 = vector.broadcast %79 : vector<32x1xf32> to vector<32x256xf32>
    %81 = arith.mulf %78, %80 : vector<32x256xf32>
    %82 = vector.broadcast %46 : vector<1x256xf32> to vector<32x256xf32>
    %83 = arith.mulf %81, %82 : vector<32x256xf32>
    %84 = arith.addf %77, %83 : vector<32x256xf32>
    %c0_33 = arith.constant 0 : index
    %c128_34 = arith.constant 128 : index
    %85 = vector.load %arg16[%c0_33, %c128_34] : memref<32x512xf32, #tpu.memory_space<vmem>>, vector<32x256xf32>
    %c0_35 = arith.constant 0 : index
    %c4 = arith.constant 4 : index
    %86 = vector.load %arg5[%c0_35, %c4] : memref<32x9xf32, #tpu.memory_space<vmem>>, vector<32x1xf32>
    %87 = vector.broadcast %86 : vector<32x1xf32> to vector<32x256xf32>
    %88 = arith.mulf %85, %87 : vector<32x256xf32>
    %89 = arith.addf %84, %88 : vector<32x256xf32>
    %c0_36 = arith.constant 0 : index
    %c129 = arith.constant 129 : index
    %90 = vector.load %arg16[%c0_36, %c129] : memref<32x512xf32, #tpu.memory_space<vmem>>, vector<32x256xf32>
    %c0_37 = arith.constant 0 : index
    %c5 = arith.constant 5 : index
    %91 = vector.load %arg5[%c0_37, %c5] : memref<32x9xf32, #tpu.memory_space<vmem>>, vector<32x1xf32>
    %92 = vector.broadcast %91 : vector<32x1xf32> to vector<32x256xf32>
    %93 = arith.mulf %90, %92 : vector<32x256xf32>
    %94 = vector.broadcast %57 : vector<1x256xf32> to vector<32x256xf32>
    %95 = arith.mulf %93, %94 : vector<32x256xf32>
    %96 = arith.addf %89, %95 : vector<32x256xf32>
    %c0_38 = arith.constant 0 : index
    %c143 = arith.constant 143 : index
    %97 = vector.load %arg16[%c0_38, %c143] : memref<32x512xf32, #tpu.memory_space<vmem>>, vector<32x256xf32>
    %c0_39 = arith.constant 0 : index
    %c6 = arith.constant 6 : index
    %98 = vector.load %arg5[%c0_39, %c6] : memref<32x9xf32, #tpu.memory_space<vmem>>, vector<32x1xf32>
    %99 = vector.broadcast %98 : vector<32x1xf32> to vector<32x256xf32>
    %100 = arith.mulf %97, %99 : vector<32x256xf32>
    %101 = vector.broadcast %46 : vector<1x256xf32> to vector<32x256xf32>
    %102 = arith.mulf %100, %101 : vector<32x256xf32>
    %103 = arith.addf %96, %102 : vector<32x256xf32>
    %c0_40 = arith.constant 0 : index
    %c144 = arith.constant 144 : index
    %104 = vector.load %arg16[%c0_40, %c144] : memref<32x512xf32, #tpu.memory_space<vmem>>, vector<32x256xf32>
    %c0_41 = arith.constant 0 : index
    %c7 = arith.constant 7 : index
    %105 = vector.load %arg5[%c0_41, %c7] : memref<32x9xf32, #tpu.memory_space<vmem>>, vector<32x1xf32>
    %106 = vector.broadcast %105 : vector<32x1xf32> to vector<32x256xf32>
    %107 = arith.mulf %104, %106 : vector<32x256xf32>
    %108 = arith.addf %103, %107 : vector<32x256xf32>
    %c0_42 = arith.constant 0 : index
    %c145 = arith.constant 145 : index
    %109 = vector.load %arg16[%c0_42, %c145] : memref<32x512xf32, #tpu.memory_space<vmem>>, vector<32x256xf32>
    %c0_43 = arith.constant 0 : index
    %c8 = arith.constant 8 : index
    %110 = vector.load %arg5[%c0_43, %c8] : memref<32x9xf32, #tpu.memory_space<vmem>>, vector<32x1xf32>
    %111 = vector.broadcast %110 : vector<32x1xf32> to vector<32x256xf32>
    %112 = arith.mulf %109, %111 : vector<32x256xf32>
    %113 = vector.broadcast %57 : vector<1x256xf32> to vector<32x256xf32>
    %114 = arith.mulf %112, %113 : vector<32x256xf32>
    %115 = arith.addf %108, %114 : vector<32x256xf32>
    %c0_44 = arith.constant 0 : index
    %c0_45 = arith.constant 0 : index
    %116 = vector.load %arg6[%c0_44, %c0_45] : memref<32x1xf32, #tpu.memory_space<vmem>>, vector<32x1xf32>
    %117 = vector.broadcast %116 : vector<32x1xf32> to vector<32x256xf32>
    %118 = arith.mulf %115, %117 : vector<32x256xf32>
    %c0_46 = arith.constant 0 : index
    %c0_47 = arith.constant 0 : index
    %119 = vector.load %arg7[%c0_46, %c0_47] : memref<32x1xf32, #tpu.memory_space<vmem>>, vector<32x1xf32>
    %120 = vector.broadcast %119 : vector<32x1xf32> to vector<32x256xf32>
    %121 = arith.addf %118, %120 : vector<32x256xf32>
    %122 = arith.negf %121 : vector<32x256xf32>
    %123 = math.exp %122 : vector<32x256xf32>
    %cst_48 = arith.constant 1.000000e+00 : f32
    %124 = vector.broadcast %cst_48 : f32 to vector<32x256xf32>
    %125 = arith.addf %124, %123 : vector<32x256xf32>
    %126 = arith.divf %124, %125 : vector<32x256xf32>
    %127 = arith.mulf %121, %126 : vector<32x256xf32>
    %cst_49 = arith.constant dense<0.000000e+00> : vector<32xf32>
    %128 = vector.multi_reduction <add>, %127, %cst_49 [1] : vector<32x256xf32> to vector<32xf32>
    %129 = vector.shape_cast %128 : vector<32xf32> to vector<32x1xf32>
    %cst_50 = arith.constant 2.560000e+02 : f32
    %130 = vector.broadcast %cst_50 : f32 to vector<32x1xf32>
    %131 = arith.divf %129, %130 : vector<32x1xf32>
    %c0_51 = arith.constant 0 : index
    %c0_52 = arith.constant 0 : index
    %132 = vector.load %arg8[%c0_51, %c0_52] : memref<32x2xf32, #tpu.memory_space<vmem>>, vector<32x2xf32>
    %133 = vector.broadcast %131 : vector<32x1xf32> to vector<32x2xf32>
    %134 = arith.mulf %132, %133 : vector<32x2xf32>
    %cst_53 = arith.constant dense<0.000000e+00> : vector<2xf32>
    %135 = vector.multi_reduction <add>, %134, %cst_53 [0] : vector<32x2xf32> to vector<2xf32>
    %136 = vector.shape_cast %135 : vector<2xf32> to vector<1x2xf32>
    %c0_54 = arith.constant 0 : index
    %c0_55 = arith.constant 0 : index
    %137 = vector.load %arg9[%c0_54, %c0_55] : memref<1x2xf32, #tpu.memory_space<vmem>>, vector<1x2xf32>
    %138 = arith.addf %136, %137 : vector<1x2xf32>
    %139 = arith.negf %138 : vector<1x2xf32>
    %140 = math.exp %139 : vector<1x2xf32>
    %cst_56 = arith.constant 1.000000e+00 : f32
    %141 = vector.broadcast %cst_56 : f32 to vector<1x2xf32>
    %142 = arith.addf %141, %140 : vector<1x2xf32>
    %143 = arith.divf %141, %142 : vector<1x2xf32>
    %144 = arith.mulf %138, %143 : vector<1x2xf32>
    %c0_57 = arith.constant 0 : index
    %c0_58 = arith.constant 0 : index
    %145 = vector.load %arg11[%c0_57, %c0_58] : memref<32x1xf32, #tpu.memory_space<vmem>>, vector<32x1xf32>
    %c0_59 = arith.constant 0 : index
    %c0_60 = arith.constant 0 : index
    %146 = vector.load %arg10[%c0_59, %c0_60] : memref<32x2xf32, #tpu.memory_space<vmem>>, vector<32x1xf32>
    %147 = vector.extract_strided_slice %144 {offsets = [0, 0], sizes = [1, 1], strides = [1, 1]} : vector<1x2xf32> to vector<1x1xf32>
    %148 = vector.broadcast %147 : vector<1x1xf32> to vector<32x1xf32>
    %149 = arith.mulf %146, %148 : vector<32x1xf32>
    %150 = arith.addf %145, %149 : vector<32x1xf32>
    %c0_61 = arith.constant 0 : index
    %c1_62 = arith.constant 1 : index
    %151 = vector.load %arg10[%c0_61, %c1_62] : memref<32x2xf32, #tpu.memory_space<vmem>>, vector<32x1xf32>
    %152 = vector.extract_strided_slice %144 {offsets = [0, 1], sizes = [1, 1], strides = [1, 1]} : vector<1x2xf32> to vector<1x1xf32>
    %153 = vector.broadcast %152 : vector<1x1xf32> to vector<32x1xf32>
    %154 = arith.mulf %151, %153 : vector<32x1xf32>
    %155 = arith.addf %150, %154 : vector<32x1xf32>
    %156 = arith.negf %155 : vector<32x1xf32>
    %157 = math.exp %156 : vector<32x1xf32>
    %cst_63 = arith.constant 1.000000e+00 : f32
    %158 = vector.broadcast %cst_63 : f32 to vector<32x1xf32>
    %159 = arith.addf %158, %157 : vector<32x1xf32>
    %160 = arith.divf %158, %159 : vector<32x1xf32>
    %161 = vector.broadcast %160 : vector<32x1xf32> to vector<32x256xf32>
    %162 = arith.mulf %127, %161 : vector<32x256xf32>
    %c0_64 = arith.constant 0 : index
    %c0_65 = arith.constant 0 : index
    %163 = vector.load %arg12[%c0_64, %c0_65] : memref<8x32xf32, #tpu.memory_space<vmem>>, vector<8x32xf32>
    %cst_66 = arith.constant dense<0.000000e+00> : vector<8x256xf32>
    %164 = tpu.matmul %163, %162, %cst_66 {dimension_numbers = #tpu.dot_dimension_numbers<[1], [0], [0], [1], [0, 0, 1, 1], [], []>} : vector<8x32xf32>, vector<32x256xf32>, vector<8x256xf32> -> vector<8x256xf32>
    %c0_67 = arith.constant 0 : index
    %c0_68 = arith.constant 0 : index
    %165 = vector.load %arg13[%c0_67, %c0_68] : memref<8x1xf32, #tpu.memory_space<vmem>>, vector<8x1xf32>
    %166 = vector.broadcast %165 : vector<8x1xf32> to vector<8x256xf32>
    %167 = arith.mulf %164, %166 : vector<8x256xf32>
    %c0_69 = arith.constant 0 : index
    %c0_70 = arith.constant 0 : index
    %168 = vector.load %arg14[%c0_69, %c0_70] : memref<8x1xf32, #tpu.memory_space<vmem>>, vector<8x1xf32>
    %169 = vector.broadcast %168 : vector<8x1xf32> to vector<8x256xf32>
    %170 = arith.addf %167, %169 : vector<8x256xf32>
    %171 = arith.addf %170, %1 : vector<8x256xf32>
    %c0_71 = arith.constant 0 : index
    %c0_72 = arith.constant 0 : index
    %c0_73 = arith.constant 0 : index
    %172 = vector.load %arg15[%c0_71, %c0_72, %c0_73] : memref<1x8x256xf32, #tpu.memory_space<vmem>>, vector<1x8x256xf32>
    %173 = vector.shape_cast %172 : vector<1x8x256xf32> to vector<8x256xf32>
    %174 = vector.shape_cast %171 : vector<8x256xf32> to vector<1x8x256xf32>
    tpu.vector_store %arg15[%c0_71, %c0_72, %c0_73], %174 {strides = array<i32>} : memref<1x8x256xf32, #tpu.memory_space<vmem>>, vector<1x8x256xf32>,
    return
  }
  func.func @transform_0(%arg0: i32) -> (i32, i32, i32) {
    %c0_i32 = arith.constant 0 : i32
    %c0_i32_0 = arith.constant 0 : i32
    %c0_i32_1 = arith.constant 0 : i32
    return %arg0, %c0_i32, %c0_i32_0 : i32, i32, i32
  }
  func.func @transform_1(%arg0: i32) -> (i32, i32) {
    %c0_i32 = arith.constant 0 : i32
    %c0_i32_0 = arith.constant 0 : i32
    %c0_i32_1 = arith.constant 0 : i32
    return %c0_i32, %c0_i32_0 : i32, i32
  }
  func.func @transform_2(%arg0: i32) -> (i32, i32) {
    %c0_i32 = arith.constant 0 : i32
    %c0_i32_0 = arith.constant 0 : i32
    %c0_i32_1 = arith.constant 0 : i32
    return %c0_i32, %c0_i32_0 : i32, i32
  }
  func.func @transform_3(%arg0: i32) -> (i32, i32) {
    %c0_i32 = arith.constant 0 : i32
    %c0_i32_0 = arith.constant 0 : i32
    %c0_i32_1 = arith.constant 0 : i32
    return %c0_i32, %c0_i32_0 : i32, i32
  }
  func.func @transform_4(%arg0: i32) -> (i32, i32) {
    %c0_i32 = arith.constant 0 : i32
    %c0_i32_0 = arith.constant 0 : i32
    %c0_i32_1 = arith.constant 0 : i32
    return %c0_i32, %c0_i32_0 : i32, i32
  }
  func.func @transform_5(%arg0: i32) -> (i32, i32) {
    %c0_i32 = arith.constant 0 : i32
    %c0_i32_0 = arith.constant 0 : i32
    %c0_i32_1 = arith.constant 0 : i32
    return %c0_i32, %c0_i32_0 : i32, i32
  }
  func.func @transform_6(%arg0: i32) -> (i32, i32) {
    %c0_i32 = arith.constant 0 : i32
    %c0_i32_0 = arith.constant 0 : i32
    %c0_i32_1 = arith.constant 0 : i32
    return %c0_i32, %c0_i32_0 : i32, i32
  }
  func.func @transform_7(%arg0: i32) -> (i32, i32) {
    %c0_i32 = arith.constant 0 : i32
    %c0_i32_0 = arith.constant 0 : i32
    %c0_i32_1 = arith.constant 0 : i32
    return %c0_i32, %c0_i32_0 : i32, i32
  }
  func.func @transform_8(%arg0: i32) -> (i32, i32) {
    %c0_i32 = arith.constant 0 : i32
    %c0_i32_0 = arith.constant 0 : i32
    %c0_i32_1 = arith.constant 0 : i32
    return %c0_i32, %c0_i32_0 : i32, i32
  }
  func.func @transform_9(%arg0: i32) -> (i32, i32) {
    %c0_i32 = arith.constant 0 : i32
    %c0_i32_0 = arith.constant 0 : i32
    %c0_i32_1 = arith.constant 0 : i32
    return %c0_i32, %c0_i32_0 : i32, i32
  }
  func.func @transform_10(%arg0: i32) -> (i32, i32) {
    %c0_i32 = arith.constant 0 : i32
    %c0_i32_0 = arith.constant 0 : i32
    %c0_i32_1 = arith.constant 0 : i32
    return %c0_i32, %c0_i32_0 : i32, i32
  }
  func.func @transform_11(%arg0: i32) -> (i32, i32) {
    %c0_i32 = arith.constant 0 : i32
    %c0_i32_0 = arith.constant 0 : i32
    %c0_i32_1 = arith.constant 0 : i32
    return %c0_i32, %c0_i32_0 : i32, i32
  }
  func.func @transform_12(%arg0: i32) -> (i32, i32) {
    %c0_i32 = arith.constant 0 : i32
    %c0_i32_0 = arith.constant 0 : i32
    %c0_i32_1 = arith.constant 0 : i32
    return %c0_i32, %c0_i32_0 : i32, i32
  }
  func.func @transform_13(%arg0: i32) -> (i32, i32) {
    %c0_i32 = arith.constant 0 : i32
    %c0_i32_0 = arith.constant 0 : i32
    %c0_i32_1 = arith.constant 0 : i32
    return %c0_i32, %c0_i32_0 : i32, i32
  }
  func.func @transform_14(%arg0: i32) -> (i32, i32, i32) {
    %c0_i32 = arith.constant 0 : i32
    %c0_i32_0 = arith.constant 0 : i32
    %c0_i32_1 = arith.constant 0 : i32
    return %arg0, %c0_i32, %c0_i32_0 : i32, i32, i32
  }
}

</mosaic_0001>

<llo_original>
// kernel: _lambda_.1
$region0: #{_lambda_.1}
  #allocation0 [shape = 'u32[]', space=smem, size = 0x4, offset = 0x4, fixed_abs, tag = 'smem constant byte address 0x4 - core index']
  #allocation1 [shape = 'u32[144,128]{1,0:T(1,128)}', space=vmem, size = 0x12000, scoped, tag = 'internal scratch']
  #allocation2 [shape = 'f32[32,512]{1,0:T(8,128)}', space=vmem, size = 0x10000, scoped, tag = 'scratch operand']
  %s0 = inlined_call_operand.vmem [shape: f32[2,8,256], index: 0, kind: input, shape index: {}]
  %s1 = inlined_call_operand.vmem [shape: f32[32,8], index: 1, kind: input, shape index: {}]
  %s2 = inlined_call_operand.vmem [shape: f32[32,1], index: 2, kind: input, shape index: {}]
  %s3 = inlined_call_operand.vmem [shape: f32[32,1], index: 3, kind: input, shape index: {}]
  %s4 = inlined_call_operand.vmem [shape: f32[32,9], index: 4, kind: input, shape index: {}]
  %s5 = inlined_call_operand.vmem [shape: f32[32,1], index: 5, kind: input, shape index: {}]
  %s6 = inlined_call_operand.vmem [shape: f32[32,1], index: 6, kind: input, shape index: {}]
  %s7 = inlined_call_operand.vmem [shape: f32[32,2], index: 7, kind: input, shape index: {}]
  %s8 = inlined_call_operand.vmem [shape: f32[1,2], index: 8, kind: input, shape index: {}]
  %s9 = inlined_call_operand.vmem [shape: f32[32,2], index: 9, kind: input, shape index: {}]
  %s10 = inlined_call_operand.vmem [shape: f32[32,1], index: 10, kind: input, shape index: {}]
  %s11 = inlined_call_operand.hbm [shape: f32[8,32], index: 11, kind: input, shape index: {}]
  %s12 = inlined_call_operand.hbm [shape: f32[8,1], index: 12, kind: input, shape index: {}]
  %s13 = inlined_call_operand.hbm [shape: f32[8,1], index: 13, kind: input, shape index: {}]
  %s14 = inlined_call_operand.vmem [shape: f32[2,8,256], index: 14, kind: output, shape index: {}]
  %s15 = sld [smem:[#allocation0]]
  $region101: #{_lambda_.1} parent=0
    _
  %s17 = ssub.s32 1, %s15
  %s18 = scalar_select 0, %s17, %s15
  $region1: #{_lambda_.1} parent=0
    #allocation3 [shape = 'u8[4096]{0}', space=vmem, size = 0x1000, scoped, tag = 'input window, operand 11, single buffered']
    #allocation4 [shape = 's32[2]{0}', space=sflag, size = 0x8, scoped, tag = 'scoped memory for _lambda_.1']
    #allocation5 [shape = 'u8[4096]{0}', space=vmem, size = 0x1000, scoped, tag = 'input window, operand 12, single buffered']
    #allocation6 [shape = 's32[1]{0}', space=sflag, size = 0x4, scoped, tag = 'scoped memory for _lambda_.1']
    #allocation7 [shape = 'u8[4096]{0}', space=vmem, size = 0x1000, scoped, tag = 'input window, operand 13, single buffered']
    %19 = vsyncpa [#allocation4], 0
    %20 = vsyncpa [#allocation6], 0
    loop: start=0, step=1, limit=4
    $region2: #{_lambda_.1} parent=1 // loop_pre_header
      _
    $region3: #{_lambda_.1} parent=1 // loop_header
      %s22 = sphi 0, %s26
      %p23 = scmp.ge.s32.totalorder %s22, 4
      %s32 = sphi 0, %s34
      %s35 = sphi 0, %s32
      %s36 = sphi 0, %s35
      %s52 = sphi 0, %s36
      %s56 = sphi 0, %s56
      %s58 = sphi 0, %s56
      %s59 = sphi 0, %s58
      %s73 = sphi 0, %s59
      %s77 = sphi 0, %s77
      %s79 = sphi 0, %s77
      %s80 = sphi 0, %s79
      %s94 = sphi 0, %s80
      %s98 = sphi 0, %s98
      %s100 = sphi 0, %s98
      %s101 = sphi 0, %s100
      %s115 = sphi 0, %s101
      %s119 = sphi 0, %s119
      %s121 = sphi 0, %s119
      %s122 = sphi 0, %s121
      %s136 = sphi 0, %s122
      %s140 = sphi 0, %s140
      %s142 = sphi 0, %s140
      %s143 = sphi 0, %s142
      %s157 = sphi 0, %s143
      %s161 = sphi 0, %s161
      %s163 = sphi 0, %s161
      %s164 = sphi 0, %s163
      %s178 = sphi 0, %s164
      %s182 = sphi 0, %s182
      %s184 = sphi 0, %s182
      %s185 = sphi 0, %s184
      %s199 = sphi 0, %s185
      %s203 = sphi 0, %s203
      %s205 = sphi 0, %s203
      %s206 = sphi 0, %s205
      %s220 = sphi 0, %s206
      %s224 = sphi 0, %s224
      %s226 = sphi 0, %s224
      %s227 = sphi 0, %s226
      %s241 = sphi 0, %s227
      %s245 = sphi 0, %s245
      %s247 = sphi 0, %s245
      %s248 = sphi 0, %s247
      %s262 = sphi 0, %s248
      %s266 = sphi 0, %s266
      %s268 = sphi 0, %s266
      %s269 = sphi 0, %s268
      %s283 = sphi 0, %s269
      %s287 = sphi 0, %s287
      %s289 = sphi 0, %s287
      %s290 = sphi 0, %s289
      %s304 = sphi 0, %s290
      %s308 = sphi 0, %s308
      %s310 = sphi 0, %s308
      %s311 = sphi 0, %s310
      %s325 = sphi 0, %s311
      %s331 = sphi 0, %s333
      %s334 = sphi 0, %s331
      %s335 = sphi 0, %s334
      %s351 = sphi 0, %s335
    $region4: #{_lambda_.1} parent=1 // loop_header_branch
      %25 = sbr.rel (%p23) target = $region8
    $region5: #{_lambda_.1} parent=1 // loop_body
      %s27 = ssub.s32 %s22, 1
      %s28 = ssub.s32 %s22, 2
      %s29 = sadd.s32 %s22, 1
      %s30 = ssub.s32 %s22, %s29
      %p31 = scmp.eq.s32.totalorder %s30, 0
      %s33 = sadd.s32 %s32, 1
      %s34 = scalar_select %p31, %s32, %s33
      %p37 = pneg %p31
      %p38 = scmp.eq.s32.totalorder %s22, 1
      %p39 = por %p37, %p38
      %p40 = scmp.ne.s32.totalorder %s32, %s35
      %p41 = scmp.eq.s32.totalorder %s22, 0
      %p42 = por %p40, %p41
      %p43 = scmp.ne.s32.totalorder %s32, %s35
      %p44 = scmp.eq.s32.totalorder %s27, 1
      %p45 = por %p43, %p44
      %p46 = scmp.ne.s32.totalorder %s35, %s36
      %p47 = scmp.eq.s32.totalorder %s27, 0
      %p48 = por %p46, %p47
      %p49 = scmp.ne.s32.totalorder %s35, %s36
      %p50 = scmp.eq.s32.totalorder %s28, 1
      %p51 = por %p49, %p50
      %p53 = scmp.ne.s32.totalorder %s36, %s52
      %p54 = scmp.eq.s32.totalorder %s28, 0
      %p55 = por %p53, %p54
      %s57 = sadd.s32 %s56, 1
      %p60 = scmp.eq.s32.totalorder %s22, 1
      %p61 = scmp.ne.s32.totalorder %s56, %s58
      %p62 = scmp.eq.s32.totalorder %s22, 0
      %p63 = por %p61, %p62
      %p64 = scmp.ne.s32.totalorder %s56, %s58
      %p65 = scmp.eq.s32.totalorder %s27, 1
      %p66 = por %p64, %p65
      %p67 = scmp.ne.s32.totalorder %s58, %s59
      %p68 = scmp.eq.s32.totalorder %s27, 0
      %p69 = por %p67, %p68
      %p70 = scmp.ne.s32.totalorder %s58, %s59
      %p71 = scmp.eq.s32.totalorder %s28, 1
      %p72 = por %p70, %p71
      %p74 = scmp.ne.s32.totalorder %s59, %s73
      %p75 = scmp.eq.s32.totalorder %s28, 0
      %p76 = por %p74, %p75
      %s78 = sadd.s32 %s77, 1
      %p81 = scmp.eq.s32.totalorder %s22, 1
      %p82 = scmp.ne.s32.totalorder %s77, %s79
      %p83 = scmp.eq.s32.totalorder %s22, 0
      %p84 = por %p82, %p83
      %p85 = scmp.ne.s32.totalorder %s77, %s79
      %p86 = scmp.eq.s32.totalorder %s27, 1
      %p87 = por %p85, %p86
      %p88 = scmp.ne.s32.totalorder %s79, %s80
      %p89 = scmp.eq.s32.totalorder %s27, 0
      %p90 = por %p88, %p89
      %p91 = scmp.ne.s32.totalorder %s79, %s80
      %p92 = scmp.eq.s32.totalorder %s28, 1
      %p93 = por %p91, %p92
      %p95 = scmp.ne.s32.totalorder %s80, %s94
      %p96 = scmp.eq.s32.totalorder %s28, 0
      %p97 = por %p95, %p96
      %s99 = sadd.s32 %s98, 1
      %p102 = scmp.eq.s32.totalorder %s22, 1
      %p103 = scmp.ne.s32.totalorder %s98, %s100
      %p104 = scmp.eq.s32.totalorder %s22, 0
      %p105 = por %p103, %p104
      %p106 = scmp.ne.s32.totalorder %s98, %s100
      %p107 = scmp.eq.s32.totalorder %s27, 1
      %p108 = por %p106, %p107
      %p109 = scmp.ne.s32.totalorder %s100, %s101
      %p110 = scmp.eq.s32.totalorder %s27, 0
      %p111 = por %p109, %p110
      %p112 = scmp.ne.s32.totalorder %s100, %s101
      %p113 = scmp.eq.s32.totalorder %s28, 1
      %p114 = por %p112, %p113
      %p116 = scmp.ne.s32.totalorder %s101, %s115
      %p117 = scmp.eq.s32.totalorder %s28, 0
      %p118 = por %p116, %p117
      %s120 = sadd.s32 %s119, 1
      %p123 = scmp.eq.s32.totalorder %s22, 1
      %p124 = scmp.ne.s32.totalorder %s119, %s121
      %p125 = scmp.eq.s32.totalorder %s22, 0
      %p126 = por %p124, %p125
      %p127 = scmp.ne.s32.totalorder %s119, %s121
      %p128 = scmp.eq.s32.totalorder %s27, 1
      %p129 = por %p127, %p128
      %p130 = scmp.ne.s32.totalorder %s121, %s122
      %p131 = scmp.eq.s32.totalorder %s27, 0
      %p132 = por %p130, %p131
      %p133 = scmp.ne.s32.totalorder %s121, %s122
      %p134 = scmp.eq.s32.totalorder %s28, 1
      %p135 = por %p133, %p134
      %p137 = scmp.ne.s32.totalorder %s122, %s136
      %p138 = scmp.eq.s32.totalorder %s28, 0
      %p139 = por %p137, %p138
      %s141 = sadd.s32 %s140, 1
      %p144 = scmp.eq.s32.totalorder %s22, 1
      %p145 = scmp.ne.s32.totalorder %s140, %s142
      %p146 = scmp.eq.s32.totalorder %s22, 0
      %p147 = por %p145, %p146
      %p148 = scmp.ne.s32.totalorder %s140, %s142
      %p149 = scmp.eq.s32.totalorder %s27, 1
      %p150 = por %p148, %p149
      %p151 = scmp.ne.s32.totalorder %s142, %s143
      %p152 = scmp.eq.s32.totalorder %s27, 0
      %p153 = por %p151, %p152
      %p154 = scmp.ne.s32.totalorder %s142, %s143
      %p155 = scmp.eq.s32.totalorder %s28, 1
      %p156 = por %p154, %p155
      %p158 = scmp.ne.s32.totalorder %s143, %s157
      %p159 = scmp.eq.s32.totalorder %s28, 0
      %p160 = por %p158, %p159
      %s162 = sadd.s32 %s161, 1
      %p165 = scmp.eq.s32.totalorder %s22, 1
      %p166 = scmp.ne.s32.totalorder %s161, %s163
      %p167 = scmp.eq.s32.totalorder %s22, 0
      %p168 = por %p166, %p167
      %p169 = scmp.ne.s32.totalorder %s161, %s163
      %p170 = scmp.eq.s32.totalorder %s27, 1
      %p171 = por %p169, %p170
      %p172 = scmp.ne.s32.totalorder %s163, %s164
      %p173 = scmp.eq.s32.totalorder %s27, 0
      %p174 = por %p172, %p173
      %p175 = scmp.ne.s32.totalorder %s163, %s164
      %p176 = scmp.eq.s32.totalorder %s28, 1
      %p177 = por %p175, %p176
      %p179 = scmp.ne.s32.totalorder %s164, %s178
      %p180 = scmp.eq.s32.totalorder %s28, 0
      %p181 = por %p179, %p180
      %s183 = sadd.s32 %s182, 1
      %p186 = scmp.eq.s32.totalorder %s22, 1
      %p187 = scmp.ne.s32.totalorder %s182, %s184
      %p188 = scmp.eq.s32.totalorder %s22, 0
      %p189 = por %p187, %p188
      %p190 = scmp.ne.s32.totalorder %s182, %s184
      %p191 = scmp.eq.s32.totalorder %s27, 1
      %p192 = por %p190, %p191
      %p193 = scmp.ne.s32.totalorder %s184, %s185
      %p194 = scmp.eq.s32.totalorder %s27, 0
      %p195 = por %p193, %p194
      %p196 = scmp.ne.s32.totalorder %s184, %s185
      %p197 = scmp.eq.s32.totalorder %s28, 1
      %p198 = por %p196, %p197
      %p200 = scmp.ne.s32.totalorder %s185, %s199
      %p201 = scmp.eq.s32.totalorder %s28, 0
      %p202 = por %p200, %p201
      %s204 = sadd.s32 %s203, 1
      %p207 = scmp.eq.s32.totalorder %s22, 1
      %p208 = scmp.ne.s32.totalorder %s203, %s205
      %p209 = scmp.eq.s32.totalorder %s22, 0
      %p210 = por %p208, %p209
      %p211 = scmp.ne.s32.totalorder %s203, %s205
      %p212 = scmp.eq.s32.totalorder %s27, 1
      %p213 = por %p211, %p212
      %p214 = scmp.ne.s32.totalorder %s205, %s206
      %p215 = scmp.eq.s32.totalorder %s27, 0
      %p216 = por %p214, %p215
      %p217 = scmp.ne.s32.totalorder %s205, %s206
      %p218 = scmp.eq.s32.totalorder %s28, 1
      %p219 = por %p217, %p218
      %p221 = scmp.ne.s32.totalorder %s206, %s220
      %p222 = scmp.eq.s32.totalorder %s28, 0
      %p223 = por %p221, %p222
      %s225 = sadd.s32 %s224, 1
      %p228 = scmp.eq.s32.totalorder %s22, 1
      %p229 = scmp.ne.s32.totalorder %s224, %s226
      %p230 = scmp.eq.s32.totalorder %s22, 0
      %p231 = por %p229, %p230
      %p232 = scmp.ne.s32.totalorder %s224, %s226
      %p233 = scmp.eq.s32.totalorder %s27, 1
      %p234 = por %p232, %p233
      %p235 = scmp.ne.s32.totalorder %s226, %s227
      %p236 = scmp.eq.s32.totalorder %s27, 0
      %p237 = por %p235, %p236
      %p238 = scmp.ne.s32.totalorder %s226, %s227
      %p239 = scmp.eq.s32.totalorder %s28, 1
      %p240 = por %p238, %p239
      %p242 = scmp.ne.s32.totalorder %s227, %s241
      %p243 = scmp.eq.s32.totalorder %s28, 0
      %p244 = por %p242, %p243
      %s246 = sadd.s32 %s245, 1
      %p249 = scmp.eq.s32.totalorder %s22, 1
      %p250 = scmp.ne.s32.totalorder %s245, %s247
      %p251 = scmp.eq.s32.totalorder %s22, 0
      %p252 = por %p250, %p251
      %p253 = scmp.ne.s32.totalorder %s245, %s247
      %p254 = scmp.eq.s32.totalorder %s27, 1
      %p255 = por %p253, %p254
      %p256 = scmp.ne.s32.totalorder %s247, %s248
      %p257 = scmp.eq.s32.totalorder %s27, 0
      %p258 = por %p256, %p257
      %p259 = scmp.ne.s32.totalorder %s247, %s248
      %p260 = scmp.eq.s32.totalorder %s28, 1
      %p261 = por %p259, %p260
      %p263 = scmp.ne.s32.totalorder %s248, %s262
      %p264 = scmp.eq.s32.totalorder %s28, 0
      %p265 = por %p263, %p264
      %s267 = sadd.s32 %s266, 1
      %p270 = scmp.eq.s32.totalorder %s22, 1
      %p271 = scmp.ne.s32.totalorder %s266, %s268
      %p272 = scmp.eq.s32.totalorder %s22, 0
      %p273 = por %p271, %p272
      %p274 = scmp.ne.s32.totalorder %s266, %s268
      %p275 = scmp.eq.s32.totalorder %s27, 1
      %p276 = por %p274, %p275
      %p277 = scmp.ne.s32.totalorder %s268, %s269
      %p278 = scmp.eq.s32.totalorder %s27, 0
      %p279 = por %p277, %p278
      %p280 = scmp.ne.s32.totalorder %s268, %s269
      %p281 = scmp.eq.s32.totalorder %s28, 1
      %p282 = por %p280, %p281
      %p284 = scmp.ne.s32.totalorder %s269, %s283
      %p285 = scmp.eq.s32.totalorder %s28, 0
      %p286 = por %p284, %p285
      %s288 = sadd.s32 %s287, 1
      %p291 = scmp.eq.s32.totalorder %s22, 1
      %p292 = scmp.ne.s32.totalorder %s287, %s289
      %p293 = scmp.eq.s32.totalorder %s22, 0
      %p294 = por %p292, %p293
      %p295 = scmp.ne.s32.totalorder %s287, %s289
      %p296 = scmp.eq.s32.totalorder %s27, 1
      %p297 = por %p295, %p296
      %p298 = scmp.ne.s32.totalorder %s289, %s290
      %p299 = scmp.eq.s32.totalorder %s27, 0
      %p300 = por %p298, %p299
      %p301 = scmp.ne.s32.totalorder %s289, %s290
      %p302 = scmp.eq.s32.totalorder %s28, 1
      %p303 = por %p301, %p302
      %p305 = scmp.ne.s32.totalorder %s290, %s304
      %p306 = scmp.eq.s32.totalorder %s28, 0
      %p307 = por %p305, %p306
      %s309 = sadd.s32 %s308, 1
      %p312 = scmp.eq.s32.totalorder %s22, 1
      %p313 = scmp.ne.s32.totalorder %s308, %s310
      %p314 = scmp.eq.s32.totalorder %s22, 0
      %p315 = por %p313, %p314
      %p316 = scmp.ne.s32.totalorder %s308, %s310
      %p317 = scmp.eq.s32.totalorder %s27, 1
      %p318 = por %p316, %p317
      %p319 = scmp.ne.s32.totalorder %s310, %s311
      %p320 = scmp.eq.s32.totalorder %s27, 0
      %p321 = por %p319, %p320
      %p322 = scmp.ne.s32.totalorder %s310, %s311
      %p323 = scmp.eq.s32.totalorder %s28, 1
      %p324 = por %p322, %p323
      %p326 = scmp.ne.s32.totalorder %s311, %s325
      %p327 = scmp.eq.s32.totalorder %s28, 0
      %p328 = por %p326, %p327
      %s329 = ssub.s32 %s22, %s29
      %p330 = scmp.eq.s32.totalorder %s329, 0
      %s332 = sadd.s32 %s331, 1
      %s333 = scalar_select %p330, %s331, %s332
      %p336 = pneg %p330
      %p337 = scmp.eq.s32.totalorder %s22, 1
      %p338 = por %p336, %p337
      %p339 = scmp.ne.s32.totalorder %s331, %s334
      %p340 = scmp.eq.s32.totalorder %s22, 0
      %p341 = por %p339, %p340
      %p342 = scmp.ne.s32.totalorder %s331, %s334
      %p343 = scmp.eq.s32.totalorder %s27, 1
      %p344 = por %p342, %p343
      %p345 = scmp.ne.s32.totalorder %s334, %s335
      %p346 = scmp.eq.s32.totalorder %s27, 0
      %p347 = por %p345, %p346
      %p348 = scmp.ne.s32.totalorder %s334, %s335
      %p349 = scmp.eq.s32.totalorder %s28, 1
      %p350 = por %p348, %p349
      %p352 = scmp.ne.s32.totalorder %s335, %s351
      %p353 = scmp.eq.s32.totalorder %s28, 0
      %p354 = por %p352, %p353
      %p355 = scmp.le.s32.totalorder 1, %s22
      %p356 = scmp.lt.s32.totalorder %s22, 3
      %p357 = pnand %p355, %p356
      %p358 = pneg %p357
      // Predicated region
      $region9: #{_lambda_.1} parent=5 // pred_check
        _
      $region10: #{_lambda_.1} parent=5 // pred_check_branch
        %360 = sbr.rel (%p357) target = $region12
      $region11: #{_lambda_.1} parent=5 // pred_region
        %s361 = ssub.s32 %s22, 1
        // Predicated region
        $region13: #{_lambda_.1} parent=11 // pred_check
          %p362 = pneg %p69
        $region14: #{_lambda_.1} parent=11 // pred_check_branch
          %364 = sbr.rel (%p362) target = $region16
        $region15: #{_lambda_.1} parent=11 // pred_region
          _
        $region16: #{_lambda_.1} parent=11 // pred_fallthru
          _
        // Predicated region
        $region17: #{_lambda_.1} parent=11 // pred_check
          %p365 = pneg %p90
        $region18: #{_lambda_.1} parent=11 // pred_check_branch
          %367 = sbr.rel (%p365) target = $region20
        $region19: #{_lambda_.1} parent=11 // pred_region
          _
        $region20: #{_lambda_.1} parent=11 // pred_fallthru
          _
        // Predicated region
        $region21: #{_lambda_.1} parent=11 // pred_check
          %p368 = pneg %p111
        $region22: #{_lambda_.1} parent=11 // pred_check_branch
          %370 = sbr.rel (%p368) target = $region24
        $region23: #{_lambda_.1} parent=11 // pred_region
          _
        $region24: #{_lambda_.1} parent=11 // pred_fallthru
          _
        // Predicated region
        $region25: #{_lambda_.1} parent=11 // pred_check
          %p371 = pneg %p132
        $region26: #{_lambda_.1} parent=11 // pred_check_branch
          %373 = sbr.rel (%p371) target = $region28
        $region27: #{_lambda_.1} parent=11 // pred_region
          _
        $region28: #{_lambda_.1} parent=11 // pred_fallthru
          _
        // Predicated region
        $region29: #{_lambda_.1} parent=11 // pred_check
          %p374 = pneg %p153
        $region30: #{_lambda_.1} parent=11 // pred_check_branch
          %376 = sbr.rel (%p374) target = $region32
        $region31: #{_lambda_.1} parent=11 // pred_region
          _
        $region32: #{_lambda_.1} parent=11 // pred_fallthru
          _
        // Predicated region
        $region33: #{_lambda_.1} parent=11 // pred_check
          %p377 = pneg %p174
        $region34: #{_lambda_.1} parent=11 // pred_check_branch
          %379 = sbr.rel (%p377) target = $region36
        $region35: #{_lambda_.1} parent=11 // pred_region
          _
        $region36: #{_lambda_.1} parent=11 // pred_fallthru
          _
        // Predicated region
        $region37: #{_lambda_.1} parent=11 // pred_check
          %p380 = pneg %p195
        $region38: #{_lambda_.1} parent=11 // pred_check_branch
          %382 = sbr.rel (%p380) target = $region40
        $region39: #{_lambda_.1} parent=11 // pred_region
          _
        $region40: #{_lambda_.1} parent=11 // pred_fallthru
          _
        // Predicated region
        $region41: #{_lambda_.1} parent=11 // pred_check
          %p383 = pneg %p216
        $region42: #{_lambda_.1} parent=11 // pred_check_branch
          %385 = sbr.rel (%p383) target = $region44
        $region43: #{_lambda_.1} parent=11 // pred_region
          _
        $region44: #{_lambda_.1} parent=11 // pred_fallthru
          _
        // Predicated region
        $region45: #{_lambda_.1} parent=11 // pred_check
          %p386 = pneg %p237
        $region46: #{_lambda_.1} parent=11 // pred_check_branch
          %388 = sbr.rel (%p386) target = $region48
        $region47: #{_lambda_.1} parent=11 // pred_region
          _
        $region48: #{_lambda_.1} parent=11 // pred_fallthru
          _
        // Predicated region
        $region49: #{_lambda_.1} parent=11 // pred_check
          %p389 = pneg %p258
        $region50: #{_lambda_.1} parent=11 // pred_check_branch
          %391 = sbr.rel (%p389) target = $region52
        $region51: #{_lambda_.1} parent=11 // pred_region
          _
        $region52: #{_lambda_.1} parent=11 // pred_fallthru
          _
        // Predicated region
        $region53: #{_lambda_.1} parent=11 // pred_check
          %p392 = pneg %p279
        $region54: #{_lambda_.1} parent=11 // pred_check_branch
          %394 = sbr.rel (%p392) target = $region56
        $region55: #{_lambda_.1} parent=11 // pred_region
          %s396 = ssub.s32 128, 128
          %397 = vsyncadd [#allocation4], %s396
          %s399 = sshll.u32 [#allocation3], 4
          %s400 = int_to_ptr.vmem [resolvable:$true] %s399
          %402 = dma.hbm_to_vmem [thread:$0]  %s11, 128, %s400, [#allocation4]
        $region56: #{_lambda_.1} parent=11 // pred_fallthru
          _
        // Predicated region
        $region57: #{_lambda_.1} parent=11 // pred_check
          %p403 = pneg %p300
        $region58: #{_lambda_.1} parent=11 // pred_check_branch
          %405 = sbr.rel (%p403) target = $region60
        $region59: #{_lambda_.1} parent=11 // pred_region
          %s407 = ssub.s32 128, 128
          %408 = vsyncadd [#allocation6], %s407
          %s410 = sshll.u32 [#allocation5], 4
          %s411 = int_to_ptr.vmem [resolvable:$true] %s410
          %413 = dma.hbm_to_vmem [thread:$0]  %s12, 128, %s411, [#allocation6]
        $region60: #{_lambda_.1} parent=11 // pred_fallthru
          _
        // Predicated region
        $region61: #{_lambda_.1} parent=11 // pred_check
          %p414 = pneg %p321
        $region62: #{_lambda_.1} parent=11 // pred_check_branch
          %416 = sbr.rel (%p414) target = $region64
        $region63: #{_lambda_.1} parent=11 // pred_region
          %s418 = ssub.s32 128, 128
          %419 = vsyncadd [#allocation6], %s418
          %s421 = sshll.u32 [#allocation7], 4
          %s422 = int_to_ptr.vmem [resolvable:$true] %s421
          %424 = dma.hbm_to_vmem [thread:$0]  %s13, 128, %s422, [#allocation6]
        $region64: #{_lambda_.1} parent=11 // pred_fallthru
          _
      $region12: #{_lambda_.1} parent=5 // pred_fallthru
        _
      %p425 = scmp.lt.s32.totalorder %s22, 2
      // Predicated region
      $region65: #{_lambda_.1} parent=5 // pred_check
        %p426 = pneg %p425
      $region66: #{_lambda_.1} parent=5 // pred_check_branch
        %428 = sbr.rel (%p426) target = $region68
      $region67: #{_lambda_.1} parent=5 // pred_region
        // Predicated region
        $region69: #{_lambda_.1} parent=67 // pred_check
          %p429 = pneg %p42
        $region70: #{_lambda_.1} parent=67 // pred_check_branch
          %431 = sbr.rel (%p429) target = $region72
        $region71: #{_lambda_.1} parent=67 // pred_region
          %p432 = scmp.lt.s32.totalorder %s22, 1
          %s433 = scalar_select %p432, %s22, 1
          %s434 = smul.addr %s433, 2
          %s435 = smul.addr %s434, 8
          %s436 = scalar_lea.vmem %s0, %s435
        $region72: #{_lambda_.1} parent=67 // pred_fallthru
          _
      $region68: #{_lambda_.1} parent=5 // pred_fallthru
        _
      %p437 = scmp.le.s32.totalorder 1, %s22
      %p438 = scmp.lt.s32.totalorder %s22, 3
      %p439 = pnand %p437, %p438
      %p440 = pneg %p439
      // Predicated region
      $region73: #{_lambda_.1} parent=5 // pred_check
        _
      $region74: #{_lambda_.1} parent=5 // pred_check_branch
        %442 = sbr.rel (%p439) target = $region76
      $region75: #{_lambda_.1} parent=5 // pred_region
        %s443 = ssub.s32 %s22, 1
        // Predicated region
        $region77: #{_lambda_.1} parent=75 // pred_check
          %p444 = pneg %p279
        $region78: #{_lambda_.1} parent=75 // pred_check_branch
          %446 = sbr.rel (%p444) target = $region80
        $region79: #{_lambda_.1} parent=75 // pred_region
          %447 = dma.done [#allocation4], 128
        $region80: #{_lambda_.1} parent=75 // pred_fallthru
          _
        // Predicated region
        $region81: #{_lambda_.1} parent=75 // pred_check
          %p448 = pneg %p300
        $region82: #{_lambda_.1} parent=75 // pred_check_branch
          %450 = sbr.rel (%p448) target = $region84
        $region83: #{_lambda_.1} parent=75 // pred_region
          %451 = dma.done [#allocation6], 128
        $region84: #{_lambda_.1} parent=75 // pred_fallthru
          _
        // Predicated region
        $region85: #{_lambda_.1} parent=75 // pred_check
          %p452 = pneg %p321
        $region86: #{_lambda_.1} parent=75 // pred_check_branch
          %454 = sbr.rel (%p452) target = $region88
        $region87: #{_lambda_.1} parent=75 // pred_region
          %455 = dma.done [#allocation6], 128
        $region88: #{_lambda_.1} parent=75 // pred_fallthru
          _
        %p456 = scmp.lt.s32.totalorder %s27, 1
        %s457 = scalar_select %p456, %s27, 1
        %s458 = smul.addr %s457, 2
        %s459 = smul.addr %s458, 8
        %s460 = scalar_lea.vmem %s0, %s459
        %p461 = pneg %p48
        %p462 = pneg %p45
        %p463 = pneg %p69
        %p464 = pneg %p66
        %p465 = pneg %p90
        %p466 = pneg %p87
        %p467 = pneg %p111
        %p468 = pneg %p108
        %p469 = pneg %p132
        %p470 = pneg %p129
        %p471 = pneg %p153
        %p472 = pneg %p150
        %p473 = pneg %p174
        %p474 = pneg %p171
        %p475 = pneg %p195
        %p476 = pneg %p192
        %p477 = pneg %p216
        %p478 = pneg %p213
        %p479 = pneg %p237
        %p480 = pneg %p234
        %p481 = pneg %p258
        %p482 = pneg %p255
        %p483 = pneg %p279
        %p484 = pneg %p276
        %p485 = pneg %p300
        %p486 = pneg %p297
        %p487 = pneg %p321
        %p488 = pneg %p318
        %p489 = pneg %p347
        %p490 = pneg %p344
        %p491 = scmp.lt.s32.totalorder %s27, 1
        %s492 = scalar_select %p491, %s27, 1
        %s493 = smul.addr %s492, 2
        %s494 = smul.addr %s493, 8
        %s495 = scalar_lea.vmem %s14, %s494
        %p496 = scmp.lt.s32.totalorder %s27, 1
        %s497 = scalar_select %p496, %s27, 1
        %s498 = smul.addr %s497, 2
        %s499 = smul.addr %s498, 8
        %s500 = scalar_lea.vmem %s0, %s499
        %p501 = scmp.lt.s32.totalorder %s27, 1
        %s502 = scalar_select %p501, %s27, 1
        %s503 = smul.addr %s502, 2
        %s504 = smul.addr %s503, 8
        %s505 = scalar_lea.vmem %s14, %s504
        %v506 = vld [vmem:[%s500] sm:$0xff]
        %v507 = vld [vmem:[%s500 + $0x8] sm:$0xff]
        %v508 = vld [vmem:[%s1] sm:$0xff]
        %v509 = vld [vmem:[%s1 + $0x8] sm:$0xff]
        %v510 = vld [vmem:[%s1 + $0x10] sm:$0xff]
        %v511 = vld [vmem:[%s1 + $0x18] sm:$0xff]
        %vm512 = vcmask 64512
        %v514 = vsel %vm512, %v508, 0
        %v517 = vsel %vm512, %v509, 0
        %v520 = vsel %vm512, %v510, 0
        %v523 = vsel %vm512, %v511, 0
        %525 = vmatprep.subr.mxu0 0.0
        %526 = vmatpush1.msra.mxu0 0.0
        %527 = vmatprep.subr.mxu0 0.0
        %528 = vmatpush1.msra.mxu0 0.0
        %529 = vmatprep.subr.mxu0 0.0
        %530 = vmatpush1.msra.mxu0 0.0
        %531 = vmatprep.subr.mxu0 0.0
        %532 = vmatpush1.msra.mxu0 0.0
        %533 = vmatprep.subr.mxu0 0.0
        %534 = vmatpush1.msra.mxu0 0.0
        %535 = vmatprep.subr.mxu0 0.0
        %536 = vmatpush1.msra.mxu0 0.0
        %537 = vmatprep.subr.mxu0 0.0
        %538 = vmatpush1.msra.mxu0 0.0
        %539 = vmatprep.subr.mxu0 0.0
        %540 = vmatpush1.msra.mxu0 0.0
        %541 = vmatprep.subr.mxu0 0.0
        %542 = vmatpush1.msra.mxu0 0.0
        %543 = vmatprep.subr.mxu0 0.0
        %544 = vmatpush1.msra.mxu0 0.0
        %545 = vmatprep.subr.mxu0 0.0
        %546 = vmatpush1.msra.mxu0 0.0
        %547 = vmatprep.subr.mxu0 0.0
        %548 = vmatpush1.msra.mxu0 0.0
        %549 = vmatprep.subr.mxu0 0.0
        %550 = vmatpush1.msra.mxu0 0.0
        %551 = vmatprep.subr.mxu0 0.0
        %552 = vmatpush1.msra.mxu0 0.0
        %553 = vmatprep.subr.mxu0 0.0
        %554 = vmatpush1.msra.mxu0 0.0
        %555 = vmatprep.subr.mxu0 %v507
        %556 = vmatpush1.msra.mxu0 %v506
        %557 = vmatprep.subr.mxu0 0.0
        %558 = vmatpush2.msra.mxu0 0.0
        %559 = vmatprep.subr.mxu0 0.0
        %560 = vmatpush2.msra.mxu0 0.0
        %561 = vmatprep.subr.mxu0 0.0
        %562 = vmatpush2.msra.mxu0 0.0
        %563 = vmatprep.subr.mxu0 0.0
        %564 = vmatpush2.msra.mxu0 0.0
        %565 = vmatprep.subr.mxu0 0.0
        %566 = vmatpush2.msra.mxu0 0.0
        %567 = vmatprep.subr.mxu0 0.0
        %568 = vmatpush2.msra.mxu0 0.0
        %569 = vmatprep.subr.mxu0 0.0
        %570 = vmatpush2.msra.mxu0 0.0
        %571 = vmatprep.subr.mxu0 0.0
        %572 = vmatpush2.msra.mxu0 0.0
        %573 = vmatprep.subr.mxu0 0.0
        %574 = vmatpush2.msra.mxu0 0.0
        %575 = vmatprep.subr.mxu0 0.0
        %576 = vmatpush2.msra.mxu0 0.0
        %577 = vmatprep.subr.mxu0 0.0
        %578 = vmatpush2.msra.mxu0 0.0
        %579 = vmatprep.subr.mxu0 0.0
        %580 = vmatpush2.msra.mxu0 0.0
        %581 = vmatprep.subr.mxu0 0.0
        %582 = vmatpush2.msra.mxu0 0.0
        %583 = vmatprep.subr.mxu0 0.0
        %584 = vmatpush2.msra.mxu0 0.0
        %585 = vmatprep.subr.mxu0 0.0
        %586 = vmatpush2.msra.mxu0 0.0
        %587 = vmatprep.subr.mxu0 0.0
        %588 = vmatpush2.msra.mxu0 0.0
        %589 = vmatprep.mubr.f32.mxu0 0.0
        %590 = vmatmul.mubr.f32.gmra.mxu0 %v514
        %v591 = vpop.f32.mrf.mxu0
        %v592 = vadd.f32 0.0, %v591
        %v593 = vpop.f32.mrf.mxu0
        %v594 = vadd.f32 0.0, %v593
        %595 = vmatprep.mubr.f32.mxu0 0.0
        %596 = vmatmul.mubr.f32.gmra.mxu0 %v517
        %v597 = vpop.f32.mrf.mxu0
        %v598 = vadd.f32 0.0, %v597
        %v599 = vpop.f32.mrf.mxu0
        %v600 = vadd.f32 0.0, %v599
        %601 = vmatprep.mubr.f32.mxu0 0.0
        %602 = vmatmul.mubr.f32.gmra.mxu0 %v520
        %v603 = vpop.f32.mrf.mxu0
        %v604 = vadd.f32 0.0, %v603
        %v605 = vpop.f32.mrf.mxu0
        %v606 = vadd.f32 0.0, %v605
        %607 = vmatprep.mubr.f32.mxu0 0.0
        %608 = vmatmul.mubr.f32.gmra.mxu0 %v523
        %v609 = vpop.f32.mrf.mxu0
        %v610 = vadd.f32 0.0, %v609
        %v611 = vpop.f32.mrf.mxu0
        %v612 = vadd.f32 0.0, %v611
        %613 = vdwg.mxu0
        %v614 = vld [vmem:[%s2] sm:$0xff]
        %v615 = vld [vmem:[%s2 + $0x8] sm:$0xff]
        %v616 = vld [vmem:[%s2 + $0x10] sm:$0xff]
        %v617 = vld [vmem:[%s2 + $0x18] sm:$0xff]
        %619 = vset.pattern.permute.xlu0 0
        %620 = vperm.xlu0 %619, %v614
        %v621 = vpop.permute.xlu0 %620
        %624 = vset.pattern.permute.xlu0 0
        %625 = vperm.xlu0 %624, %v615
        %v626 = vpop.permute.xlu0 %625
        %629 = vset.pattern.permute.xlu0 0
        %630 = vperm.xlu0 %629, %v616
        %v631 = vpop.permute.xlu0 %630
        %634 = vset.pattern.permute.xlu0 0
        %635 = vperm.xlu0 %634, %v617
        %v636 = vpop.permute.xlu0 %635
        %v638 = vmul.f32 %v592, %v621
        %v639 = vmul.f32 %v594, %v621
        %v640 = vmul.f32 %v598, %v626
        %v641 = vmul.f32 %v600, %v626
        %v642 = vmul.f32 %v604, %v631
        %v643 = vmul.f32 %v606, %v631
        %v644 = vmul.f32 %v610, %v636
        %v645 = vmul.f32 %v612, %v636
        %v646 = vld [vmem:[%s3] sm:$0xff]
        %v647 = vld [vmem:[%s3 + $0x8] sm:$0xff]
        %v648 = vld [vmem:[%s3 + $0x10] sm:$0xff]
        %v649 = vld [vmem:[%s3 + $0x18] sm:$0xff]
        %651 = vset.pattern.permute.xlu0 0
        %652 = vperm.xlu0 %651, %v646
        %v653 = vpop.permute.xlu0 %652
        %656 = vset.pattern.permute.xlu0 0
        %657 = vperm.xlu0 %656, %v647
        %v658 = vpop.permute.xlu0 %657
        %661 = vset.pattern.permute.xlu0 0
        %662 = vperm.xlu0 %661, %v648
        %v663 = vpop.permute.xlu0 %662
        %666 = vset.pattern.permute.xlu0 0
        %667 = vperm.xlu0 %666, %v649
        %v668 = vpop.permute.xlu0 %667
        %v670 = vadd.f32 %v638, %v653
        %v671 = vadd.f32 %v639, %v653
        %v672 = vadd.f32 %v640, %v658
        %v673 = vadd.f32 %v641, %v658
        %v674 = vadd.f32 %v642, %v663
        %v675 = vadd.f32 %v643, %v663
        %v676 = vadd.f32 %v644, %v668
        %v677 = vadd.f32 %v645, %v668
        %v678 = vxor.u32 %v670, 2147483648
        %v679 = vxor.u32 %v671, 2147483648
        %v680 = vxor.u32 %v672, 2147483648
        %v681 = vxor.u32 %v673, 2147483648
        %v682 = vxor.u32 %v674, 2147483648
        %v683 = vxor.u32 %v675, 2147483648
        %v684 = vxor.u32 %v676, 2147483648
        %v685 = vxor.u32 %v677, 2147483648
        %v686 = vmul.f32 %v678, 1.442695
        %v687 = vpow.pop %v686
        %v688 = vmul.f32 %v679, 1.442695
        %v689 = vpow.pop %v688
        %v690 = vmul.f32 %v680, 1.442695
        %v691 = vpow.pop %v690
        %v692 = vmul.f32 %v681, 1.442695
        %v693 = vpow.pop %v692
        %v694 = vmul.f32 %v682, 1.442695
        %v695 = vpow.pop %v694
        %v696 = vmul.f32 %v683, 1.442695
        %v697 = vpow.pop %v696
        %v698 = vmul.f32 %v684, 1.442695
        %v699 = vpow.pop %v698
        %v700 = vmul.f32 %v685, 1.442695
        %v701 = vpow.pop %v700
        %v702 = vadd.f32 %v687, 1.0
        %v703 = vadd.f32 %v689, 1.0
        %v704 = vadd.f32 %v691, 1.0
        %v705 = vadd.f32 %v693, 1.0
        %v706 = vadd.f32 %v695, 1.0
        %v707 = vadd.f32 %v697, 1.0
        %v708 = vadd.f32 %v699, 1.0
        %v709 = vadd.f32 %v701, 1.0
        %v710 = vrcp.pop %v702
        %v711 = vmul.f32 1.0, %v710
        %v712 = vrcp.pop %v703
        %v713 = vmul.f32 1.0, %v712
        %v714 = vrcp.pop %v704
        %v715 = vmul.f32 1.0, %v714
        %v716 = vrcp.pop %v705
        %v717 = vmul.f32 1.0, %v716
        %v718 = vrcp.pop %v706
        %v719 = vmul.f32 1.0, %v718
        %v720 = vrcp.pop %v707
        %v721 = vmul.f32 1.0, %v720
        %v722 = vrcp.pop %v708
        %v723 = vmul.f32 1.0, %v722
        %v724 = vrcp.pop %v709
        %v725 = vmul.f32 1.0, %v724
        %v726 = vmul.f32 %v670, %v711
        %v727 = vmul.f32 %v671, %v713
        %v728 = vmul.f32 %v672, %v715
        %v729 = vmul.f32 %v673, %v717
        %v730 = vmul.f32 %v674, %v719
        %v731 = vmul.f32 %v675, %v721
        %v732 = vmul.f32 %v676, %v723
        %v733 = vmul.f32 %v677, %v725
        %734 = vst [vmem:[#allocation2] sm:$0xff] 0.0
        %735 = vst [vmem:[#allocation2 + $0x8] sm:$0xff] 0.0
        %736 = vst [vmem:[#allocation2 + $0x10] sm:$0xff] 0.0
        %737 = vst [vmem:[#allocation2 + $0x18] sm:$0xff] 0.0
        %738 = vst [vmem:[#allocation2 + $0x20] sm:$0xff] 0.0
        %739 = vst [vmem:[#allocation2 + $0x28] sm:$0xff] 0.0
        %740 = vst [vmem:[#allocation2 + $0x30] sm:$0xff] 0.0
        %741 = vst [vmem:[#allocation2 + $0x38] sm:$0xff] 0.0
        %742 = vst [vmem:[#allocation2 + $0x40] sm:$0xff] 0.0
        %743 = vst [vmem:[#allocation2 + $0x48] sm:$0xff] 0.0
        %744 = vst [vmem:[#allocation2 + $0x50] sm:$0xff] 0.0
        %745 = vst [vmem:[#allocation2 + $0x58] sm:$0xff] 0.0
        %746 = vst [vmem:[#allocation2 + $0x60] sm:$0xff] 0.0
        %747 = vst [vmem:[#allocation2 + $0x68] sm:$0xff] 0.0
        %748 = vst [vmem:[#allocation2 + $0x70] sm:$0xff] 0.0
        %749 = vst [vmem:[#allocation2 + $0x78] sm:$0xff] 0.0
        %750 = vst [vmem:[#allocation2 + $0x8] sm:$0xff] %v726
        %751 = vst [vmem:[#allocation2 + $0x10] sm:$0xff] %v727
        %752 = vst [vmem:[#allocation2 + $0x28] sm:$0xff] %v728
        %753 = vst [vmem:[#allocation2 + $0x30] sm:$0xff] %v729
        %754 = vst [vmem:[#allocation2 + $0x48] sm:$0xff] %v730
        %755 = vst [vmem:[#allocation2 + $0x50] sm:$0xff] %v731
        %756 = vst [vmem:[#allocation2 + $0x68] sm:$0xff] %v732
        %757 = vst [vmem:[#allocation2 + $0x70] sm:$0xff] %v733
        %v758 = vlaneseq
        %v759 = vand.u32 %v758, 127
        %v760 = vadd.s32 %v759, 128
        %vm761 = vcmp.lt.s32.totalorder %v759, 0
        %v762 = vsub.s32 0, %v759
        %v763 = vsel %vm761, %v762, %v759
        %v764 = vshrl.u32 %v763, 4
        %v765 = vand.u32 %v763, 15
        %v766 = vsub.s32 0, %v765
        %v767 = vsel %vm761, %v766, %v765
        %vm768 = vcmp.lt.s32.totalorder %v760, 0
        %v769 = vsub.s32 0, %v760
        %v770 = vsel %vm768, %v769, %v760
        %v771 = vshrl.u32 %v770, 4
        %v772 = vand.u32 %v770, 15
        %v773 = vsub.s32 0, %v772
        %v774 = vsel %vm768, %v773, %v772
        %vm775 = vcmp.ne.s32.totalorder %v767, 0
        %vm776 = vcmp.ne.s32.totalorder %v774, 0
        %vm777 = vcmp.lt.s32.totalorder %v767, 0
        %vm778 = vcmp.lt.s32.totalorder %v774, 0
        %vm779 = vmand %vm777, %vm775
        %vm780 = vmand %vm778, %vm776
        %v781 = vadd.s32 %v767, 16
        %v782 = vadd.s32 %v774, 16
        %v783 = vsel %vm779, %v781, %v767
        %v784 = vsel %vm780, %v782, %v774
        %v785 = vadd.s32 %v783, 4294967295
        %v786 = vadd.s32 %v784, 4294967295
        %vm787 = vcmp.ge.s32.totalorder %v785, 0
        %vm788 = vcmp.ge.s32.totalorder %v786, 0
        %vm789 = vcmp.lt.s32.totalorder %v785, 16
        %vm790 = vcmp.lt.s32.totalorder %v786, 16
        %vm791 = vmand %vm787, %vm789
        %vm792 = vmand %vm788, %vm790
        %v793 = vsel %vm791, 1, 0
        %v794 = vsel %vm792, 1, 0
        %v795 = vcvt.s32.f32 %v793
        %v796 = vcvt.s32.f32 %v794
        %v797 = vadd.s32 %v783, 1
        %v798 = vadd.s32 %v784, 1
        %vm799 = vcmp.ge.s32.totalorder %v797, 0
        %vm800 = vcmp.ge.s32.totalorder %v798, 0
        %vm801 = vcmp.lt.s32.totalorder %v797, 16
        %vm802 = vcmp.lt.s32.totalorder %v798, 16
        %vm803 = vmand %vm799, %vm801
        %vm804 = vmand %vm800, %vm802
        %v805 = vsel %vm803, 1, 0
        %v806 = vsel %vm804, 1, 0
        %v807 = vcvt.s32.f32 %v805
        %v808 = vcvt.s32.f32 %v806
        %v809 = vld [vmem:[#allocation2] sm:$0xff]
        %v810 = vld [vmem:[#allocation2 + $0x8] sm:$0xff]
        %v811 = vld [vmem:[#allocation2 + $0x10] sm:$0xff]
        %v812 = vld [vmem:[#allocation2 + $0x20] sm:$0xff]
        %v813 = vld [vmem:[#allocation2 + $0x28] sm:$0xff]
        %v814 = vld [vmem:[#allocation2 + $0x30] sm:$0xff]
        %v815 = vld [vmem:[#allocation2 + $0x40] sm:$0xff]
        %v816 = vld [vmem:[#allocation2 + $0x48] sm:$0xff]
        %v817 = vld [vmem:[#allocation2 + $0x50] sm:$0xff]
        %v818 = vld [vmem:[#allocation2 + $0x60] sm:$0xff]
        %v819 = vld [vmem:[#allocation2 + $0x68] sm:$0xff]
        %v820 = vld [vmem:[#allocation2 + $0x70] sm:$0xff]
        %v821 = vld [vmem:[%s4] sm:$0xff]
        %v822 = vld [vmem:[%s4 + $0x8] sm:$0xff]
        %v823 = vld [vmem:[%s4 + $0x10] sm:$0xff]
        %v824 = vld [vmem:[%s4 + $0x18] sm:$0xff]
        %826 = vset.pattern.permute.xlu0 0
        %827 = vperm.xlu0 %826, %v821
        %v828 = vpop.permute.xlu0 %827
        %831 = vset.pattern.permute.xlu0 0
        %832 = vperm.xlu0 %831, %v822
        %v833 = vpop.permute.xlu0 %832
        %836 = vset.pattern.permute.xlu0 0
        %837 = vperm.xlu0 %836, %v823
        %v838 = vpop.permute.xlu0 %837
        %841 = vset.pattern.permute.xlu0 0
        %842 = vperm.xlu0 %841, %v824
        %v843 = vpop.permute.xlu0 %842
        %v845 = vmul.f32 %v809, %v828
        %v846 = vmul.f32 %v810, %v828
        %v847 = vmul.f32 %v811, %v828
        %v848 = vmul.f32 %v812, %v833
        %v849 = vmul.f32 %v813, %v833
        %v850 = vmul.f32 %v814, %v833
        %v851 = vmul.f32 %v815, %v838
        %v852 = vmul.f32 %v816, %v838
        %v853 = vmul.f32 %v817, %v838
        %v854 = vmul.f32 %v818, %v843
        %v855 = vmul.f32 %v819, %v843
        %v856 = vmul.f32 %v820, %v843
        %859 = vrot.lane.b32.xlu0 %v795, 111
        %v860 = vpop.permute.xlu0 %859
        %861 = vrot.lane.b32.xlu0 %v796, 111
        %v862 = vpop.permute.xlu0 %861
        %vm863 = vcmask 908288
        %v864 = vsel %vm863, %v860, %v862
        %v868 = vmul.f32 %v845, %v860
        %v869 = vmul.f32 %v846, %v864
        %v870 = vmul.f32 %v847, %v862
        %v871 = vmul.f32 %v848, %v860
        %v872 = vmul.f32 %v849, %v864
        %v873 = vmul.f32 %v850, %v862
        %v874 = vmul.f32 %v851, %v860
        %v875 = vmul.f32 %v852, %v864
        %v876 = vmul.f32 %v853, %v862
        %v877 = vmul.f32 %v854, %v860
        %v878 = vmul.f32 %v855, %v864
        %v879 = vmul.f32 %v856, %v862
        %v880 = vadd.f32 %v868, 0.0
        %v881 = vadd.f32 %v869, 0.0
        %v882 = vadd.f32 %v870, 0.0
        %v883 = vadd.f32 %v871, 0.0
        %v884 = vadd.f32 %v872, 0.0
        %v885 = vadd.f32 %v873, 0.0
        %v886 = vadd.f32 %v874, 0.0
        %v887 = vadd.f32 %v875, 0.0
        %v888 = vadd.f32 %v876, 0.0
        %v889 = vadd.f32 %v877, 0.0
        %v890 = vadd.f32 %v878, 0.0
        %v891 = vadd.f32 %v879, 0.0
        %892 = vset.pattern.permute.xlu0 1
        %893 = vperm.xlu0 %892, %v821
        %v894 = vpop.permute.xlu0 %893
        %896 = vset.pattern.permute.xlu0 1
        %897 = vperm.xlu0 %896, %v822
        %v898 = vpop.permute.xlu0 %897
        %900 = vset.pattern.permute.xlu0 1
        %901 = vperm.xlu0 %900, %v823
        %v902 = vpop.permute.xlu0 %901
        %904 = vset.pattern.permute.xlu0 1
        %905 = vperm.xlu0 %904, %v824
        %v906 = vpop.permute.xlu0 %905
        %v908 = vmul.f32 %v809, %v894
        %v909 = vmul.f32 %v810, %v894
        %v910 = vmul.f32 %v811, %v894
        %v911 = vmul.f32 %v812, %v898
        %v912 = vmul.f32 %v813, %v898
        %v913 = vmul.f32 %v814, %v898
        %v914 = vmul.f32 %v815, %v902
        %v915 = vmul.f32 %v816, %v902
        %v916 = vmul.f32 %v817, %v902
        %v917 = vmul.f32 %v818, %v906
        %v918 = vmul.f32 %v819, %v906
        %v919 = vmul.f32 %v820, %v906
        %932 = vrot.lane.b32.xlu0 %v908, 127
        %v933 = vpop.permute.xlu0 %932
        %934 = vrot.lane.b32.xlu0 %v909, 127
        %v935 = vpop.permute.xlu0 %934
        %936 = vrot.lane.b32.xlu0 %v910, 127
        %v937 = vpop.permute.xlu0 %936
        %938 = vrot.lane.b32.xlu0 %v911, 127
        %v939 = vpop.permute.xlu0 %938
        %940 = vrot.lane.b32.xlu0 %v912, 127
        %v941 = vpop.permute.xlu0 %940
        %942 = vrot.lane.b32.xlu0 %v913, 127
        %v943 = vpop.permute.xlu0 %942
        %944 = vrot.lane.b32.xlu0 %v914, 127
        %v945 = vpop.permute.xlu0 %944
        %946 = vrot.lane.b32.xlu0 %v915, 127
        %v947 = vpop.permute.xlu0 %946
        %948 = vrot.lane.b32.xlu0 %v916, 127
        %v949 = vpop.permute.xlu0 %948
        %950 = vrot.lane.b32.xlu0 %v917, 127
        %v951 = vpop.permute.xlu0 %950
        %952 = vrot.lane.b32.xlu0 %v918, 127
        %v953 = vpop.permute.xlu0 %952
        %954 = vrot.lane.b32.xlu0 %v919, 127
        %v955 = vpop.permute.xlu0 %954
        %vm956 = vcmask 1039360
        %v957 = vsel %vm956, %v933, %v935
        %v958 = vsel %vm956, %v935, %v937
        %v959 = vsel %vm956, %v939, %v941
        %v960 = vsel %vm956, %v941, %v943
        %v961 = vsel %vm956, %v945, %v947
        %v962 = vsel %vm956, %v947, %v949
        %v963 = vsel %vm956, %v951, %v953
        %v964 = vsel %vm956, %v953, %v955
        %v977 = vadd.f32 %v880, %v957
        %v978 = vadd.f32 %v881, %v958
        %v979 = vadd.f32 %v882, %v937
        %v980 = vadd.f32 %v883, %v959
        %v981 = vadd.f32 %v884, %v960
        %v982 = vadd.f32 %v885, %v943
        %v983 = vadd.f32 %v886, %v961
        %v984 = vadd.f32 %v887, %v962
        %v985 = vadd.f32 %v888, %v949
        %v986 = vadd.f32 %v889, %v963
        %v987 = vadd.f32 %v890, %v964
        %v988 = vadd.f32 %v891, %v955
        %989 = vset.pattern.permute.xlu0 2
        %990 = vperm.xlu0 %989, %v821
        %v991 = vpop.permute.xlu0 %990
        %993 = vset.pattern.permute.xlu0 2
        %994 = vperm.xlu0 %993, %v822
        %v995 = vpop.permute.xlu0 %994
        %997 = vset.pattern.permute.xlu0 2
        %998 = vperm.xlu0 %997, %v823
        %v999 = vpop.permute.xlu0 %998
        %1001 = vset.pattern.permute.xlu0 2
        %1002 = vperm.xlu0 %1001, %v824
        %v1003 = vpop.permute.xlu0 %1002
        %v1005 = vmul.f32 %v809, %v991
        %v1006 = vmul.f32 %v810, %v991
        %v1007 = vmul.f32 %v811, %v991
        %v1008 = vmul.f32 %v812, %v995
        %v1009 = vmul.f32 %v813, %v995
        %v1010 = vmul.f32 %v814, %v995
        %v1011 = vmul.f32 %v815, %v999
        %v1012 = vmul.f32 %v816, %v999
        %v1013 = vmul.f32 %v817, %v999
        %v1014 = vmul.f32 %v818, %v1003
        %v1015 = vmul.f32 %v819, %v1003
        %v1016 = vmul.f32 %v820, %v1003
        %1019 = vrot.lane.b32.xlu0 %v807, 113
        %v1020 = vpop.permute.xlu0 %1019
        %1021 = vrot.lane.b32.xlu0 %v808, 113
        %v1022 = vpop.permute.xlu0 %1021
        %vm1023 = vcmask 924672
        %v1024 = vsel %vm1023, %v1020, %v1022
        %v1028 = vmul.f32 %v1005, %v1020
        %v1029 = vmul.f32 %v1006, %v1024
        %v1030 = vmul.f32 %v1007, %v1022
        %v1031 = vmul.f32 %v1008, %v1020
        %v1032 = vmul.f32 %v1009, %v1024
        %v1033 = vmul.f32 %v1010, %v1022
        %v1034 = vmul.f32 %v1011, %v1020
        %v1035 = vmul.f32 %v1012, %v1024
        %v1036 = vmul.f32 %v1013, %v1022
        %v1037 = vmul.f32 %v1014, %v1020
        %v1038 = vmul.f32 %v1015, %v1024
        %v1039 = vmul.f32 %v1016, %v1022
        %1052 = vrot.lane.b32.xlu0 %v1028, 126
        %v1053 = vpop.permute.xlu0 %1052
        %1054 = vrot.lane.b32.xlu0 %v1029, 126
        %v1055 = vpop.permute.xlu0 %1054
        %1056 = vrot.lane.b32.xlu0 %v1030, 126
        %v1057 = vpop.permute.xlu0 %1056
        %1058 = vrot.lane.b32.xlu0 %v1031, 126
        %v1059 = vpop.permute.xlu0 %1058
        %1060 = vrot.lane.b32.xlu0 %v1032, 126
        %v1061 = vpop.permute.xlu0 %1060
        %1062 = vrot.lane.b32.xlu0 %v1033, 126
        %v1063 = vpop.permute.xlu0 %1062
        %1064 = vrot.lane.b32.xlu0 %v1034, 126
        %v1065 = vpop.permute.xlu0 %1064
        %1066 = vrot.lane.b32.xlu0 %v1035, 126
        %v1067 = vpop.permute.xlu0 %1066
        %1068 = vrot.lane.b32.xlu0 %v1036, 126
        %v1069 = vpop.permute.xlu0 %1068
        %1070 = vrot.lane.b32.xlu0 %v1037, 126
        %v1071 = vpop.permute.xlu0 %1070
        %1072 = vrot.lane.b32.xlu0 %v1038, 126
        %v1073 = vpop.permute.xlu0 %1072
        %1074 = vrot.lane.b32.xlu0 %v1039, 126
        %v1075 = vpop.permute.xlu0 %1074
        %vm1076 = vcmask 1031168
        %v1077 = vsel %vm1076, %v1053, %v1055
        %v1078 = vsel %vm1076, %v1055, %v1057
        %v1079 = vsel %vm1076, %v1059, %v1061
        %v1080 = vsel %vm1076, %v1061, %v1063
        %v1081 = vsel %vm1076, %v1065, %v1067
        %v1082 = vsel %vm1076, %v1067, %v1069
        %v1083 = vsel %vm1076, %v1071, %v1073
        %v1084 = vsel %vm1076, %v1073, %v1075
        %v1097 = vadd.f32 %v977, %v1077
        %v1098 = vadd.f32 %v978, %v1078
        %v1099 = vadd.f32 %v979, %v1057
        %v1100 = vadd.f32 %v980, %v1079
        %v1101 = vadd.f32 %v981, %v1080
        %v1102 = vadd.f32 %v982, %v1063
        %v1103 = vadd.f32 %v983, %v1081
        %v1104 = vadd.f32 %v984, %v1082
        %v1105 = vadd.f32 %v985, %v1069
        %v1106 = vadd.f32 %v986, %v1083
        %v1107 = vadd.f32 %v987, %v1084
        %v1108 = vadd.f32 %v988, %v1075
        %1109 = vset.pattern.permute.xlu0 3
        %1110 = vperm.xlu0 %1109, %v821
        %v1111 = vpop.permute.xlu0 %1110
        %1113 = vset.pattern.permute.xlu0 3
        %1114 = vperm.xlu0 %1113, %v822
        %v1115 = vpop.permute.xlu0 %1114
        %1117 = vset.pattern.permute.xlu0 3
        %1118 = vperm.xlu0 %1117, %v823
        %v1119 = vpop.permute.xlu0 %1118
        %1121 = vset.pattern.permute.xlu0 3
        %1122 = vperm.xlu0 %1121, %v824
        %v1123 = vpop.permute.xlu0 %1122
        %v1125 = vmul.f32 %v809, %v1111
        %v1126 = vmul.f32 %v810, %v1111
        %v1127 = vmul.f32 %v811, %v1111
        %v1128 = vmul.f32 %v812, %v1115
        %v1129 = vmul.f32 %v813, %v1115
        %v1130 = vmul.f32 %v814, %v1115
        %v1131 = vmul.f32 %v815, %v1119
        %v1132 = vmul.f32 %v816, %v1119
        %v1133 = vmul.f32 %v817, %v1119
        %v1134 = vmul.f32 %v818, %v1123
        %v1135 = vmul.f32 %v819, %v1123
        %v1136 = vmul.f32 %v820, %v1123
        %1137 = vrot.lane.b32.xlu0 %v795, 127
        %v1138 = vpop.permute.xlu0 %1137
        %1139 = vrot.lane.b32.xlu0 %v796, 127
        %v1140 = vpop.permute.xlu0 %1139
        %v1141 = vsel %vm956, %v1138, %v1140
        %v1145 = vmul.f32 %v1125, %v1138
        %v1146 = vmul.f32 %v1126, %v1141
        %v1147 = vmul.f32 %v1127, %v1140
        %v1148 = vmul.f32 %v1128, %v1138
        %v1149 = vmul.f32 %v1129, %v1141
        %v1150 = vmul.f32 %v1130, %v1140
        %v1151 = vmul.f32 %v1131, %v1138
        %v1152 = vmul.f32 %v1132, %v1141
        %v1153 = vmul.f32 %v1133, %v1140
        %v1154 = vmul.f32 %v1134, %v1138
        %v1155 = vmul.f32 %v1135, %v1141
        %v1156 = vmul.f32 %v1136, %v1140
        %1169 = vrot.lane.b32.xlu0 %v1145, 112
        %v1170 = vpop.permute.xlu0 %1169
        %1171 = vrot.lane.b32.xlu0 %v1146, 112
        %v1172 = vpop.permute.xlu0 %1171
        %1173 = vrot.lane.b32.xlu0 %v1147, 112
        %v1174 = vpop.permute.xlu0 %1173
        %1175 = vrot.lane.b32.xlu0 %v1148, 112
        %v1176 = vpop.permute.xlu0 %1175
        %1177 = vrot.lane.b32.xlu0 %v1149, 112
        %v1178 = vpop.permute.xlu0 %1177
        %1179 = vrot.lane.b32.xlu0 %v1150, 112
        %v1180 = vpop.permute.xlu0 %1179
        %1181 = vrot.lane.b32.xlu0 %v1151, 112
        %v1182 = vpop.permute.xlu0 %1181
        %1183 = vrot.lane.b32.xlu0 %v1152, 112
        %v1184 = vpop.permute.xlu0 %1183
        %1185 = vrot.lane.b32.xlu0 %v1153, 112
        %v1186 = vpop.permute.xlu0 %1185
        %1187 = vrot.lane.b32.xlu0 %v1154, 112
        %v1188 = vpop.permute.xlu0 %1187
        %1189 = vrot.lane.b32.xlu0 %v1155, 112
        %v1190 = vpop.permute.xlu0 %1189
        %1191 = vrot.lane.b32.xlu0 %v1156, 112
        %v1192 = vpop.permute.xlu0 %1191
        %vm1193 = vcmask 916480
        %v1194 = vsel %vm1193, %v1170, %v1172
        %v1195 = vsel %vm1193, %v1172, %v1174
        %v1196 = vsel %vm1193, %v1176, %v1178
        %v1197 = vsel %vm1193, %v1178, %v1180
        %v1198 = vsel %vm1193, %v1182, %v1184
        %v1199 = vsel %vm1193, %v1184, %v1186
        %v1200 = vsel %vm1193, %v1188, %v1190
        %v1201 = vsel %vm1193, %v1190, %v1192
        %v1214 = vadd.f32 %v1097, %v1194
        %v1215 = vadd.f32 %v1098, %v1195
        %v1216 = vadd.f32 %v1099, %v1174
        %v1217 = vadd.f32 %v1100, %v1196
        %v1218 = vadd.f32 %v1101, %v1197
        %v1219 = vadd.f32 %v1102, %v1180
        %v1220 = vadd.f32 %v1103, %v1198
        %v1221 = vadd.f32 %v1104, %v1199
        %v1222 = vadd.f32 %v1105, %v1186
        %v1223 = vadd.f32 %v1106, %v1200
        %v1224 = vadd.f32 %v1107, %v1201
        %v1225 = vadd.f32 %v1108, %v1192
        %1226 = vset.pattern.permute.xlu0 4
        %1227 = vperm.xlu0 %1226, %v821
        %v1228 = vpop.permute.xlu0 %1227
        %1230 = vset.pattern.permute.xlu0 4
        %1231 = vperm.xlu0 %1230, %v822
        %v1232 = vpop.permute.xlu0 %1231
        %1234 = vset.pattern.permute.xlu0 4
        %1235 = vperm.xlu0 %1234, %v823
        %v1236 = vpop.permute.xlu0 %1235
        %1238 = vset.pattern.permute.xlu0 4
        %1239 = vperm.xlu0 %1238, %v824
        %v1240 = vpop.permute.xlu0 %1239
        %v1242 = vmul.f32 %v810, %v1228
        %v1243 = vmul.f32 %v811, %v1228
        %v1244 = vmul.f32 %v813, %v1232
        %v1245 = vmul.f32 %v814, %v1232
        %v1246 = vmul.f32 %v816, %v1236
        %v1247 = vmul.f32 %v817, %v1236
        %v1248 = vmul.f32 %v819, %v1240
        %v1249 = vmul.f32 %v820, %v1240
        %1258 = vrot.lane.b32.xlu0 %v1242, 111
        %v1259 = vpop.permute.xlu0 %1258
        %1260 = vrot.lane.b32.xlu0 %v1243, 111
        %v1261 = vpop.permute.xlu0 %1260
        %1262 = vrot.lane.b32.xlu0 %v1244, 111
        %v1263 = vpop.permute.xlu0 %1262
        %1264 = vrot.lane.b32.xlu0 %v1245, 111
        %v1265 = vpop.permute.xlu0 %1264
        %1266 = vrot.lane.b32.xlu0 %v1246, 111
        %v1267 = vpop.permute.xlu0 %1266
        %1268 = vrot.lane.b32.xlu0 %v1247, 111
        %v1269 = vpop.permute.xlu0 %1268
        %1270 = vrot.lane.b32.xlu0 %v1248, 111
        %v1271 = vpop.permute.xlu0 %1270
        %1272 = vrot.lane.b32.xlu0 %v1249, 111
        %v1273 = vpop.permute.xlu0 %1272
        %v1274 = vsel %vm863, %v1259, %v1261
        %v1275 = vsel %vm863, %v1263, %v1265
        %v1276 = vsel %vm863, %v1267, %v1269
        %v1277 = vsel %vm863, %v1271, %v1273
        %v1290 = vadd.f32 %v1214, %v1259
        %v1291 = vadd.f32 %v1215, %v1274
        %v1292 = vadd.f32 %v1216, %v1261
        %v1293 = vadd.f32 %v1217, %v1263
        %v1294 = vadd.f32 %v1218, %v1275
        %v1295 = vadd.f32 %v1219, %v1265
        %v1296 = vadd.f32 %v1220, %v1267
        %v1297 = vadd.f32 %v1221, %v1276
        %v1298 = vadd.f32 %v1222, %v1269
        %v1299 = vadd.f32 %v1223, %v1271
        %v1300 = vadd.f32 %v1224, %v1277
        %v1301 = vadd.f32 %v1225, %v1273
        %v1302 = vld [vmem:[#allocation2 + $0x8] sm:$0xff]
        %v1303 = vld [vmem:[#allocation2 + $0x10] sm:$0xff]
        %v1304 = vld [vmem:[#allocation2 + $0x18] sm:$0xff]
        %v1305 = vld [vmem:[#allocation2 + $0x28] sm:$0xff]
        %v1306 = vld [vmem:[#allocation2 + $0x30] sm:$0xff]
        %v1307 = vld [vmem:[#allocation2 + $0x38] sm:$0xff]
        %v1308 = vld [vmem:[#allocation2 + $0x48] sm:$0xff]
        %v1309 = vld [vmem:[#allocation2 + $0x50] sm:$0xff]
        %v1310 = vld [vmem:[#allocation2 + $0x58] sm:$0xff]
        %v1311 = vld [vmem:[#allocation2 + $0x68] sm:$0xff]
        %v1312 = vld [vmem:[#allocation2 + $0x70] sm:$0xff]
        %v1313 = vld [vmem:[#allocation2 + $0x78] sm:$0xff]
        %1314 = vset.pattern.permute.xlu0 5
        %1315 = vperm.xlu0 %1314, %v821
        %v1316 = vpop.permute.xlu0 %1315
        %1318 = vset.pattern.permute.xlu0 5
        %1319 = vperm.xlu0 %1318, %v822
        %v1320 = vpop.permute.xlu0 %1319
        %1322 = vset.pattern.permute.xlu0 5
        %1323 = vperm.xlu0 %1322, %v823
        %v1324 = vpop.permute.xlu0 %1323
        %1326 = vset.pattern.permute.xlu0 5
        %1327 = vperm.xlu0 %1326, %v824
        %v1328 = vpop.permute.xlu0 %1327
        %v1330 = vmul.f32 %v1302, %v1316
        %v1331 = vmul.f32 %v1303, %v1316
        %v1332 = vmul.f32 %v1304, %v1316
        %v1333 = vmul.f32 %v1305, %v1320
        %v1334 = vmul.f32 %v1306, %v1320
        %v1335 = vmul.f32 %v1307, %v1320
        %v1336 = vmul.f32 %v1308, %v1324
        %v1337 = vmul.f32 %v1309, %v1324
        %v1338 = vmul.f32 %v1310, %v1324
        %v1339 = vmul.f32 %v1311, %v1328
        %v1340 = vmul.f32 %v1312, %v1328
        %v1341 = vmul.f32 %v1313, %v1328
        %1342 = vrot.lane.b32.xlu0 %v807, 1
        %v1343 = vpop.permute.xlu0 %1342
        %1344 = vrot.lane.b32.xlu0 %v808, 1
        %v1345 = vpop.permute.xlu0 %1344
        %vm1346 = vcmask 7168
        %v1347 = vsel %vm1346, %v1343, %v1345
        %v1351 = vmul.f32 %v1330, %v1343
        %v1352 = vmul.f32 %v1331, %v1347
        %v1353 = vmul.f32 %v1332, %v1345
        %v1354 = vmul.f32 %v1333, %v1343
        %v1355 = vmul.f32 %v1334, %v1347
        %v1356 = vmul.f32 %v1335, %v1345
        %v1357 = vmul.f32 %v1336, %v1343
        %v1358 = vmul.f32 %v1337, %v1347
        %v1359 = vmul.f32 %v1338, %v1345
        %v1360 = vmul.f32 %v1339, %v1343
        %v1361 = vmul.f32 %v1340, %v1347
        %v1362 = vmul.f32 %v1341, %v1345
        %1375 = vrot.lane.b32.xlu0 %v1351, 110
        %v1376 = vpop.permute.xlu0 %1375
        %1377 = vrot.lane.b32.xlu0 %v1352, 110
        %v1378 = vpop.permute.xlu0 %1377
        %1379 = vrot.lane.b32.xlu0 %v1353, 110
        %v1380 = vpop.permute.xlu0 %1379
        %1381 = vrot.lane.b32.xlu0 %v1354, 110
        %v1382 = vpop.permute.xlu0 %1381
        %1383 = vrot.lane.b32.xlu0 %v1355, 110
        %v1384 = vpop.permute.xlu0 %1383
        %1385 = vrot.lane.b32.xlu0 %v1356, 110
        %v1386 = vpop.permute.xlu0 %1385
        %1387 = vrot.lane.b32.xlu0 %v1357, 110
        %v1388 = vpop.permute.xlu0 %1387
        %1389 = vrot.lane.b32.xlu0 %v1358, 110
        %v1390 = vpop.permute.xlu0 %1389
        %1391 = vrot.lane.b32.xlu0 %v1359, 110
        %v1392 = vpop.permute.xlu0 %1391
        %1393 = vrot.lane.b32.xlu0 %v1360, 110
        %v1394 = vpop.permute.xlu0 %1393
        %1395 = vrot.lane.b32.xlu0 %v1361, 110
        %v1396 = vpop.permute.xlu0 %1395
        %1397 = vrot.lane.b32.xlu0 %v1362, 110
        %v1398 = vpop.permute.xlu0 %1397
        %vm1399 = vcmask 900096
        %v1400 = vsel %vm1399, %v1376, %v1378
        %v1401 = vsel %vm1399, %v1378, %v1380
        %v1402 = vsel %vm1399, %v1382, %v1384
        %v1403 = vsel %vm1399, %v1384, %v1386
        %v1404 = vsel %vm1399, %v1388, %v1390
        %v1405 = vsel %vm1399, %v1390, %v1392
        %v1406 = vsel %vm1399, %v1394, %v1396
        %v1407 = vsel %vm1399, %v1396, %v1398
        %v1420 = vadd.f32 %v1290, %v1376
        %v1421 = vadd.f32 %v1291, %v1400
        %v1422 = vadd.f32 %v1292, %v1401
        %v1423 = vadd.f32 %v1293, %v1382
        %v1424 = vadd.f32 %v1294, %v1402
        %v1425 = vadd.f32 %v1295, %v1403
        %v1426 = vadd.f32 %v1296, %v1388
        %v1427 = vadd.f32 %v1297, %v1404
        %v1428 = vadd.f32 %v1298, %v1405
        %v1429 = vadd.f32 %v1299, %v1394
        %v1430 = vadd.f32 %v1300, %v1406
        %v1431 = vadd.f32 %v1301, %v1407
        %1432 = vset.pattern.permute.xlu0 6
        %1433 = vperm.xlu0 %1432, %v821
        %v1434 = vpop.permute.xlu0 %1433
        %1436 = vset.pattern.permute.xlu0 6
        %1437 = vperm.xlu0 %1436, %v822
        %v1438 = vpop.permute.xlu0 %1437
        %1440 = vset.pattern.permute.xlu0 6
        %1441 = vperm.xlu0 %1440, %v823
        %v1442 = vpop.permute.xlu0 %1441
        %1444 = vset.pattern.permute.xlu0 6
        %1445 = vperm.xlu0 %1444, %v824
        %v1446 = vpop.permute.xlu0 %1445
        %v1448 = vmul.f32 %v1302, %v1434
        %v1449 = vmul.f32 %v1303, %v1434
        %v1450 = vmul.f32 %v1304, %v1434
        %v1451 = vmul.f32 %v1305, %v1438
        %v1452 = vmul.f32 %v1306, %v1438
        %v1453 = vmul.f32 %v1307, %v1438
        %v1454 = vmul.f32 %v1308, %v1442
        %v1455 = vmul.f32 %v1309, %v1442
        %v1456 = vmul.f32 %v1310, %v1442
        %v1457 = vmul.f32 %v1311, %v1446
        %v1458 = vmul.f32 %v1312, %v1446
        %v1459 = vmul.f32 %v1313, %v1446
        %1460 = vrot.lane.b32.xlu0 %v795, 15
        %v1461 = vpop.permute.xlu0 %1460
        %1462 = vrot.lane.b32.xlu0 %v796, 15
        %v1463 = vpop.permute.xlu0 %1462
        %vm1464 = vcmask 121856
        %v1465 = vsel %vm1464, %v1461, %v1463
        %v1469 = vmul.f32 %v1448, %v1461
        %v1470 = vmul.f32 %v1449, %v1465
        %v1471 = vmul.f32 %v1450, %v1463
        %v1472 = vmul.f32 %v1451, %v1461
        %v1473 = vmul.f32 %v1452, %v1465
        %v1474 = vmul.f32 %v1453, %v1463
        %v1475 = vmul.f32 %v1454, %v1461
        %v1476 = vmul.f32 %v1455, %v1465
        %v1477 = vmul.f32 %v1456, %v1463
        %v1478 = vmul.f32 %v1457, %v1461
        %v1479 = vmul.f32 %v1458, %v1465
        %v1480 = vmul.f32 %v1459, %v1463
        %1493 = vrot.lane.b32.xlu0 %v1469, 96
        %v1494 = vpop.permute.xlu0 %1493
        %1495 = vrot.lane.b32.xlu0 %v1470, 96
        %v1496 = vpop.permute.xlu0 %1495
        %1497 = vrot.lane.b32.xlu0 %v1471, 96
        %v1498 = vpop.permute.xlu0 %1497
        %1499 = vrot.lane.b32.xlu0 %v1472, 96
        %v1500 = vpop.permute.xlu0 %1499
        %1501 = vrot.lane.b32.xlu0 %v1473, 96
        %v1502 = vpop.permute.xlu0 %1501
        %1503 = vrot.lane.b32.xlu0 %v1474, 96
        %v1504 = vpop.permute.xlu0 %1503
        %1505 = vrot.lane.b32.xlu0 %v1475, 96
        %v1506 = vpop.permute.xlu0 %1505
        %1507 = vrot.lane.b32.xlu0 %v1476, 96
        %v1508 = vpop.permute.xlu0 %1507
        %1509 = vrot.lane.b32.xlu0 %v1477, 96
        %v1510 = vpop.permute.xlu0 %1509
        %1511 = vrot.lane.b32.xlu0 %v1478, 96
        %v1512 = vpop.permute.xlu0 %1511
        %1513 = vrot.lane.b32.xlu0 %v1479, 96
        %v1514 = vpop.permute.xlu0 %1513
        %1515 = vrot.lane.b32.xlu0 %v1480, 96
        %v1516 = vpop.permute.xlu0 %1515
        %vm1517 = vcmask 785408
        %v1518 = vsel %vm1517, %v1494, %v1496
        %v1519 = vsel %vm1517, %v1496, %v1498
        %v1520 = vsel %vm1517, %v1500, %v1502
        %v1521 = vsel %vm1517, %v1502, %v1504
        %v1522 = vsel %vm1517, %v1506, %v1508
        %v1523 = vsel %vm1517, %v1508, %v1510
        %v1524 = vsel %vm1517, %v1512, %v1514
        %v1525 = vsel %vm1517, %v1514, %v1516
        %v1538 = vadd.f32 %v1420, %v1494
        %v1539 = vadd.f32 %v1421, %v1518
        %v1540 = vadd.f32 %v1422, %v1519
        %v1541 = vadd.f32 %v1423, %v1500
        %v1542 = vadd.f32 %v1424, %v1520
        %v1543 = vadd.f32 %v1425, %v1521
        %v1544 = vadd.f32 %v1426, %v1506
        %v1545 = vadd.f32 %v1427, %v1522
        %v1546 = vadd.f32 %v1428, %v1523
        %v1547 = vadd.f32 %v1429, %v1512
        %v1548 = vadd.f32 %v1430, %v1524
        %v1549 = vadd.f32 %v1431, %v1525
        %1550 = vset.pattern.permute.xlu0 7
        %1551 = vperm.xlu0 %1550, %v821
        %v1552 = vpop.permute.xlu0 %1551
        %1554 = vset.pattern.permute.xlu0 7
        %1555 = vperm.xlu0 %1554, %v822
        %v1556 = vpop.permute.xlu0 %1555
        %1558 = vset.pattern.permute.xlu0 7
        %1559 = vperm.xlu0 %1558, %v823
        %v1560 = vpop.permute.xlu0 %1559
        %1562 = vset.pattern.permute.xlu0 7
        %1563 = vperm.xlu0 %1562, %v824
        %v1564 = vpop.permute.xlu0 %1563
        %v1566 = vmul.f32 %v1302, %v1552
        %v1567 = vmul.f32 %v1303, %v1552
        %v1568 = vmul.f32 %v1304, %v1552
        %v1569 = vmul.f32 %v1305, %v1556
        %v1570 = vmul.f32 %v1306, %v1556
        %v1571 = vmul.f32 %v1307, %v1556
        %v1572 = vmul.f32 %v1308, %v1560
        %v1573 = vmul.f32 %v1309, %v1560
        %v1574 = vmul.f32 %v1310, %v1560
        %v1575 = vmul.f32 %v1311, %v1564
        %v1576 = vmul.f32 %v1312, %v1564
        %v1577 = vmul.f32 %v1313, %v1564
        %1590 = vrot.lane.b32.xlu0 %v1566, 95
        %v1591 = vpop.permute.xlu0 %1590
        %1592 = vrot.lane.b32.xlu0 %v1567, 95
        %v1593 = vpop.permute.xlu0 %1592
        %1594 = vrot.lane.b32.xlu0 %v1568, 95
        %v1595 = vpop.permute.xlu0 %1594
        %1596 = vrot.lane.b32.xlu0 %v1569, 95
        %v1597 = vpop.permute.xlu0 %1596
        %1598 = vrot.lane.b32.xlu0 %v1570, 95
        %v1599 = vpop.permute.xlu0 %1598
        %1600 = vrot.lane.b32.xlu0 %v1571, 95
        %v1601 = vpop.permute.xlu0 %1600
        %1602 = vrot.lane.b32.xlu0 %v1572, 95
        %v1603 = vpop.permute.xlu0 %1602
        %1604 = vrot.lane.b32.xlu0 %v1573, 95
        %v1605 = vpop.permute.xlu0 %1604
        %1606 = vrot.lane.b32.xlu0 %v1574, 95
        %v1607 = vpop.permute.xlu0 %1606
        %1608 = vrot.lane.b32.xlu0 %v1575, 95
        %v1609 = vpop.permute.xlu0 %1608
        %1610 = vrot.lane.b32.xlu0 %v1576, 95
        %v1611 = vpop.permute.xlu0 %1610
        %1612 = vrot.lane.b32.xlu0 %v1577, 95
        %v1613 = vpop.permute.xlu0 %1612
        %vm1614 = vcmask 777216
        %v1615 = vsel %vm1614, %v1591, %v1593
        %v1616 = vsel %vm1614, %v1593, %v1595
        %v1617 = vsel %vm1614, %v1597, %v1599
        %v1618 = vsel %vm1614, %v1599, %v1601
        %v1619 = vsel %vm1614, %v1603, %v1605
        %v1620 = vsel %vm1614, %v1605, %v1607
        %v1621 = vsel %vm1614, %v1609, %v1611
        %v1622 = vsel %vm1614, %v1611, %v1613
        %v1635 = vadd.f32 %v1538, %v1591
        %v1636 = vadd.f32 %v1539, %v1615
        %v1637 = vadd.f32 %v1540, %v1616
        %v1638 = vadd.f32 %v1541, %v1597
        %v1639 = vadd.f32 %v1542, %v1617
        %v1640 = vadd.f32 %v1543, %v1618
        %v1641 = vadd.f32 %v1544, %v1603
        %v1642 = vadd.f32 %v1545, %v1619
        %v1643 = vadd.f32 %v1546, %v1620
        %v1644 = vadd.f32 %v1547, %v1609
        %v1645 = vadd.f32 %v1548, %v1621
        %v1646 = vadd.f32 %v1549, %v1622
        %1647 = vset.pattern.permute.xlu0 8
        %1648 = vperm.xlu0 %1647, %v821
        %v1649 = vpop.permute.xlu0 %1648
        %1651 = vset.pattern.permute.xlu0 8
        %1652 = vperm.xlu0 %1651, %v822
        %v1653 = vpop.permute.xlu0 %1652
        %1655 = vset.pattern.permute.xlu0 8
        %1656 = vperm.xlu0 %1655, %v823
        %v1657 = vpop.permute.xlu0 %1656
        %1659 = vset.pattern.permute.xlu0 8
        %1660 = vperm.xlu0 %1659, %v824
        %v1661 = vpop.permute.xlu0 %1660
        %v1663 = vmul.f32 %v1302, %v1649
        %v1664 = vmul.f32 %v1303, %v1649
        %v1665 = vmul.f32 %v1304, %v1649
        %v1666 = vmul.f32 %v1305, %v1653
        %v1667 = vmul.f32 %v1306, %v1653
        %v1668 = vmul.f32 %v1307, %v1653
        %v1669 = vmul.f32 %v1308, %v1657
        %v1670 = vmul.f32 %v1309, %v1657
        %v1671 = vmul.f32 %v1310, %v1657
        %v1672 = vmul.f32 %v1311, %v1661
        %v1673 = vmul.f32 %v1312, %v1661
        %v1674 = vmul.f32 %v1313, %v1661
        %1675 = vrot.lane.b32.xlu0 %v807, 17
        %v1676 = vpop.permute.xlu0 %1675
        %1677 = vrot.lane.b32.xlu0 %v808, 17
        %v1678 = vpop.permute.xlu0 %1677
        %vm1679 = vcmask 138240
        %v1680 = vsel %vm1679, %v1676, %v1678
        %v1684 = vmul.f32 %v1663, %v1676
        %v1685 = vmul.f32 %v1664, %v1680
        %v1686 = vmul.f32 %v1665, %v1678
        %v1687 = vmul.f32 %v1666, %v1676
        %v1688 = vmul.f32 %v1667, %v1680
        %v1689 = vmul.f32 %v1668, %v1678
        %v1690 = vmul.f32 %v1669, %v1676
        %v1691 = vmul.f32 %v1670, %v1680
        %v1692 = vmul.f32 %v1671, %v1678
        %v1693 = vmul.f32 %v1672, %v1676
        %v1694 = vmul.f32 %v1673, %v1680
        %v1695 = vmul.f32 %v1674, %v1678
        %1708 = vrot.lane.b32.xlu0 %v1684, 94
        %v1709 = vpop.permute.xlu0 %1708
        %1710 = vrot.lane.b32.xlu0 %v1685, 94
        %v1711 = vpop.permute.xlu0 %1710
        %1712 = vrot.lane.b32.xlu0 %v1686, 94
        %v1713 = vpop.permute.xlu0 %1712
        %1714 = vrot.lane.b32.xlu0 %v1687, 94
        %v1715 = vpop.permute.xlu0 %1714
        %1716 = vrot.lane.b32.xlu0 %v1688, 94
        %v1717 = vpop.permute.xlu0 %1716
        %1718 = vrot.lane.b32.xlu0 %v1689, 94
        %v1719 = vpop.permute.xlu0 %1718
        %1720 = vrot.lane.b32.xlu0 %v1690, 94
        %v1721 = vpop.permute.xlu0 %1720
        %1722 = vrot.lane.b32.xlu0 %v1691, 94
        %v1723 = vpop.permute.xlu0 %1722
        %1724 = vrot.lane.b32.xlu0 %v1692, 94
        %v1725 = vpop.permute.xlu0 %1724
        %1726 = vrot.lane.b32.xlu0 %v1693, 94
        %v1727 = vpop.permute.xlu0 %1726
        %1728 = vrot.lane.b32.xlu0 %v1694, 94
        %v1729 = vpop.permute.xlu0 %1728
        %1730 = vrot.lane.b32.xlu0 %v1695, 94
        %v1731 = vpop.permute.xlu0 %1730
        %vm1732 = vcmask 769024
        %v1733 = vsel %vm1732, %v1709, %v1711
        %v1734 = vsel %vm1732, %v1711, %v1713
        %v1735 = vsel %vm1732, %v1715, %v1717
        %v1736 = vsel %vm1732, %v1717, %v1719
        %v1737 = vsel %vm1732, %v1721, %v1723
        %v1738 = vsel %vm1732, %v1723, %v1725
        %v1739 = vsel %vm1732, %v1727, %v1729
        %v1740 = vsel %vm1732, %v1729, %v1731
        %v1753 = vadd.f32 %v1635, %v1709
        %v1754 = vadd.f32 %v1636, %v1733
        %v1755 = vadd.f32 %v1637, %v1734
        %v1756 = vadd.f32 %v1638, %v1715
        %v1757 = vadd.f32 %v1639, %v1735
        %v1758 = vadd.f32 %v1640, %v1736
        %v1759 = vadd.f32 %v1641, %v1721
        %v1760 = vadd.f32 %v1642, %v1737
        %v1761 = vadd.f32 %v1643, %v1738
        %v1762 = vadd.f32 %v1644, %v1727
        %v1763 = vadd.f32 %v1645, %v1739
        %v1764 = vadd.f32 %v1646, %v1740
        %v1765 = vld [vmem:[%s5] sm:$0xff]
        %v1766 = vld [vmem:[%s5 + $0x8] sm:$0xff]
        %v1767 = vld [vmem:[%s5 + $0x10] sm:$0xff]
        %v1768 = vld [vmem:[%s5 + $0x18] sm:$0xff]
        %1770 = vset.pattern.permute.xlu0 0
        %1771 = vperm.xlu0 %1770, %v1765
        %v1772 = vpop.permute.xlu0 %1771
        %1775 = vset.pattern.permute.xlu0 0
        %1776 = vperm.xlu0 %1775, %v1766
        %v1777 = vpop.permute.xlu0 %1776
        %1780 = vset.pattern.permute.xlu0 0
        %1781 = vperm.xlu0 %1780, %v1767
        %v1782 = vpop.permute.xlu0 %1781
        %1785 = vset.pattern.permute.xlu0 0
        %1786 = vperm.xlu0 %1785, %v1768
        %v1787 = vpop.permute.xlu0 %1786
        %v1789 = vmul.f32 %v1753, %v1772
        %v1790 = vmul.f32 %v1754, %v1772
        %v1791 = vmul.f32 %v1755, %v1772
        %v1792 = vmul.f32 %v1756, %v1777
        %v1793 = vmul.f32 %v1757, %v1777
        %v1794 = vmul.f32 %v1758, %v1777
        %v1795 = vmul.f32 %v1759, %v1782
        %v1796 = vmul.f32 %v1760, %v1782
        %v1797 = vmul.f32 %v1761, %v1782
        %v1798 = vmul.f32 %v1762, %v1787
        %v1799 = vmul.f32 %v1763, %v1787
        %v1800 = vmul.f32 %v1764, %v1787
        %v1801 = vld [vmem:[%s6] sm:$0xff]
        %v1802 = vld [vmem:[%s6 + $0x8] sm:$0xff]
        %v1803 = vld [vmem:[%s6 + $0x10] sm:$0xff]
        %v1804 = vld [vmem:[%s6 + $0x18] sm:$0xff]
        %1806 = vset.pattern.permute.xlu0 0
        %1807 = vperm.xlu0 %1806, %v1801
        %v1808 = vpop.permute.xlu0 %1807
        %1811 = vset.pattern.permute.xlu0 0
        %1812 = vperm.xlu0 %1811, %v1802
        %v1813 = vpop.permute.xlu0 %1812
        %1816 = vset.pattern.permute.xlu0 0
        %1817 = vperm.xlu0 %1816, %v1803
        %v1818 = vpop.permute.xlu0 %1817
        %1821 = vset.pattern.permute.xlu0 0
        %1822 = vperm.xlu0 %1821, %v1804
        %v1823 = vpop.permute.xlu0 %1822
        %v1825 = vadd.f32 %v1789, %v1808
        %v1826 = vadd.f32 %v1790, %v1808
        %v1827 = vadd.f32 %v1791, %v1808
        %v1828 = vadd.f32 %v1792, %v1813
        %v1829 = vadd.f32 %v1793, %v1813
        %v1830 = vadd.f32 %v1794, %v1813
        %v1831 = vadd.f32 %v1795, %v1818
        %v1832 = vadd.f32 %v1796, %v1818
        %v1833 = vadd.f32 %v1797, %v1818
        %v1834 = vadd.f32 %v1798, %v1823
        %v1835 = vadd.f32 %v1799, %v1823
        %v1836 = vadd.f32 %v1800, %v1823
        %v1837 = vxor.u32 %v1825, 2147483648
        %v1838 = vxor.u32 %v1826, 2147483648
        %v1839 = vxor.u32 %v1827, 2147483648
        %v1840 = vxor.u32 %v1828, 2147483648
        %v1841 = vxor.u32 %v1829, 2147483648
        %v1842 = vxor.u32 %v1830, 2147483648
        %v1843 = vxor.u32 %v1831, 2147483648
        %v1844 = vxor.u32 %v1832, 2147483648
        %v1845 = vxor.u32 %v1833, 2147483648
        %v1846 = vxor.u32 %v1834, 2147483648
        %v1847 = vxor.u32 %v1835, 2147483648
        %v1848 = vxor.u32 %v1836, 2147483648
        %v1849 = vmul.f32 %v1837, 1.442695
        %v1850 = vpow.pop %v1849
        %v1851 = vmul.f32 %v1838, 1.442695
        %v1852 = vpow.pop %v1851
        %v1853 = vmul.f32 %v1839, 1.442695
        %v1854 = vpow.pop %v1853
        %v1855 = vmul.f32 %v1840, 1.442695
        %v1856 = vpow.pop %v1855
        %v1857 = vmul.f32 %v1841, 1.442695
        %v1858 = vpow.pop %v1857
        %v1859 = vmul.f32 %v1842, 1.442695
        %v1860 = vpow.pop %v1859
        %v1861 = vmul.f32 %v1843, 1.442695
        %v1862 = vpow.pop %v1861
        %v1863 = vmul.f32 %v1844, 1.442695
        %v1864 = vpow.pop %v1863
        %v1865 = vmul.f32 %v1845, 1.442695
        %v1866 = vpow.pop %v1865
        %v1867 = vmul.f32 %v1846, 1.442695
        %v1868 = vpow.pop %v1867
        %v1869 = vmul.f32 %v1847, 1.442695
        %v1870 = vpow.pop %v1869
        %v1871 = vmul.f32 %v1848, 1.442695
        %v1872 = vpow.pop %v1871
        %v1873 = vadd.f32 %v1850, 1.0
        %v1874 = vadd.f32 %v1852, 1.0
        %v1875 = vadd.f32 %v1854, 1.0
        %v1876 = vadd.f32 %v1856, 1.0
        %v1877 = vadd.f32 %v1858, 1.0
        %v1878 = vadd.f32 %v1860, 1.0
        %v1879 = vadd.f32 %v1862, 1.0
        %v1880 = vadd.f32 %v1864, 1.0
        %v1881 = vadd.f32 %v1866, 1.0
        %v1882 = vadd.f32 %v1868, 1.0
        %v1883 = vadd.f32 %v1870, 1.0
        %v1884 = vadd.f32 %v1872, 1.0
        %v1885 = vrcp.pop %v1873
        %v1886 = vmul.f32 1.0, %v1885
        %v1887 = vrcp.pop %v1874
        %v1888 = vmul.f32 1.0, %v1887
        %v1889 = vrcp.pop %v1875
        %v1890 = vmul.f32 1.0, %v1889
        %v1891 = vrcp.pop %v1876
        %v1892 = vmul.f32 1.0, %v1891
        %v1893 = vrcp.pop %v1877
        %v1894 = vmul.f32 1.0, %v1893
        %v1895 = vrcp.pop %v1878
        %v1896 = vmul.f32 1.0, %v1895
        %v1897 = vrcp.pop %v1879
        %v1898 = vmul.f32 1.0, %v1897
        %v1899 = vrcp.pop %v1880
        %v1900 = vmul.f32 1.0, %v1899
        %v1901 = vrcp.pop %v1881
        %v1902 = vmul.f32 1.0, %v1901
        %v1903 = vrcp.pop %v1882
        %v1904 = vmul.f32 1.0, %v1903
        %v1905 = vrcp.pop %v1883
        %v1906 = vmul.f32 1.0, %v1905
        %v1907 = vrcp.pop %v1884
        %v1908 = vmul.f32 1.0, %v1907
        %v1909 = vmul.f32 %v1825, %v1886
        %v1910 = vmul.f32 %v1826, %v1888
        %v1911 = vmul.f32 %v1827, %v1890
        %v1912 = vmul.f32 %v1828, %v1892
        %v1913 = vmul.f32 %v1829, %v1894
        %v1914 = vmul.f32 %v1830, %v1896
        %v1915 = vmul.f32 %v1831, %v1898
        %v1916 = vmul.f32 %v1832, %v1900
        %v1917 = vmul.f32 %v1833, %v1902
        %v1918 = vmul.f32 %v1834, %v1904
        %v1919 = vmul.f32 %v1835, %v1906
        %v1920 = vmul.f32 %v1836, %v1908
        %1933 = vrot.lane.b32.xlu0 %v1909, 17
        %v1934 = vpop.permute.xlu0 %1933
        %1935 = vrot.lane.b32.xlu0 %v1910, 17
        %v1936 = vpop.permute.xlu0 %1935
        %1937 = vrot.lane.b32.xlu0 %v1911, 17
        %v1938 = vpop.permute.xlu0 %1937
        %1939 = vrot.lane.b32.xlu0 %v1912, 17
        %v1940 = vpop.permute.xlu0 %1939
        %1941 = vrot.lane.b32.xlu0 %v1913, 17
        %v1942 = vpop.permute.xlu0 %1941
        %1943 = vrot.lane.b32.xlu0 %v1914, 17
        %v1944 = vpop.permute.xlu0 %1943
        %1945 = vrot.lane.b32.xlu0 %v1915, 17
        %v1946 = vpop.permute.xlu0 %1945
        %1947 = vrot.lane.b32.xlu0 %v1916, 17
        %v1948 = vpop.permute.xlu0 %1947
        %1949 = vrot.lane.b32.xlu0 %v1917, 17
        %v1950 = vpop.permute.xlu0 %1949
        %1951 = vrot.lane.b32.xlu0 %v1918, 17
        %v1952 = vpop.permute.xlu0 %1951
        %1953 = vrot.lane.b32.xlu0 %v1919, 17
        %v1954 = vpop.permute.xlu0 %1953
        %1955 = vrot.lane.b32.xlu0 %v1920, 17
        %v1956 = vpop.permute.xlu0 %1955
        %v1957 = vsel %vm1679, %v1934, %v1936
        %v1958 = vsel %vm1679, %v1936, %v1938
        %v1959 = vsel %vm1679, %v1940, %v1942
        %v1960 = vsel %vm1679, %v1942, %v1944
        %v1961 = vsel %vm1679, %v1946, %v1948
        %v1962 = vsel %vm1679, %v1948, %v1950
        %v1963 = vsel %vm1679, %v1952, %v1954
        %v1964 = vsel %vm1679, %v1954, %v1956
        %v1973 = vadd.f32 %v1957, %v1958
        %1974 = vadd.xlane.f32.xlu0 %v1973
        %v1975 = vpop.xlane.xlu0 %1974
        %v1976 = vadd.f32 %v1959, %v1960
        %1977 = vadd.xlane.f32.xlu0 %v1976
        %v1978 = vpop.xlane.xlu0 %1977
        %v1979 = vadd.f32 %v1961, %v1962
        %1980 = vadd.xlane.f32.xlu0 %v1979
        %v1981 = vpop.xlane.xlu0 %1980
        %v1982 = vadd.f32 %v1963, %v1964
        %1983 = vadd.xlane.f32.xlu0 %v1982
        %v1984 = vpop.xlane.xlu0 %1983
        %v1985 = vrcp.pop 256.0
        %v1986 = vmul.f32 %v1975, %v1985
        %v1987 = vmul.f32 %v1978, %v1985
        %v1988 = vmul.f32 %v1981, %v1985
        %v1989 = vmul.f32 %v1984, %v1985
        %v1990 = vld [vmem:[%s7] sm:$0xff]
        %v1991 = vld [vmem:[%s7 + $0x8] sm:$0xff]
        %v1992 = vld [vmem:[%s7 + $0x10] sm:$0xff]
        %v1993 = vld [vmem:[%s7 + $0x18] sm:$0xff]
        %v1994 = vmul.f32 %v1990, %v1986
        %v1995 = vmul.f32 %v1991, %v1987
        %v1996 = vmul.f32 %v1992, %v1988
        %v1997 = vmul.f32 %v1993, %v1989
        %vm1998 = vcmask 15360
        %v1999 = vsel %vm1998, %v1994, 0.0
        %v2000 = vsel %vm1998, %v1995, 0.0
        %v2001 = vadd.f32 %v1999, %v2000
        %v2002 = vsel %vm1998, %v1996, 0.0
        %v2003 = vadd.f32 %v2001, %v2002
        %v2004 = vsel %vm1998, %v1997, 0.0
        %v2005 = vadd.f32 %v2003, %v2004
        %v2006 = vrot.slane %v2005, 4
        %v2007 = vadd.f32 %v2005, %v2006
        %v2008 = vrot.slane %v2007, 2
        %v2009 = vadd.f32 %v2007, %v2008
        %v2010 = vrot.slane %v2009, 1
        %v2011 = vadd.f32 %v2009, %v2010
        %v2012 = vld [vmem:[%s8] sm:$0x1]
        %v2013 = vadd.f32 %v2011, %v2012
        %v2014 = vxor.u32 %v2013, 2147483648
        %v2015 = vmul.f32 %v2014, 1.442695
        %v2016 = vpow.pop %v2015
        %v2017 = vadd.f32 %v2016, 1.0
        %v2018 = vrcp.pop %v2017
        %v2019 = vmul.f32 1.0, %v2018
        %v2020 = vmul.f32 %v2013, %v2019
        %v2021 = vld [vmem:[%s10] sm:$0xff]
        %v2022 = vld [vmem:[%s10 + $0x8] sm:$0xff]
        %v2023 = vld [vmem:[%s10 + $0x10] sm:$0xff]
        %v2024 = vld [vmem:[%s10 + $0x18] sm:$0xff]
        %v2025 = vld [vmem:[%s9] sm:$0xff]
        %v2026 = vld [vmem:[%s9 + $0x8] sm:$0xff]
        %v2027 = vld [vmem:[%s9 + $0x10] sm:$0xff]
        %v2028 = vld [vmem:[%s9 + $0x18] sm:$0xff]
        %v2029 = vlaneseq
        %v2030 = vshrl.u32 %v2029, 7
        %v2031 = vsub.s32 0, %v2030
        %v2032 = vrot.slane %v2020, %v2031
        %v2033 = vmul.f32 %v2025, %v2032
        %v2034 = vmul.f32 %v2026, %v2032
        %v2035 = vmul.f32 %v2027, %v2032
        %v2036 = vmul.f32 %v2028, %v2032
        %v2037 = vadd.f32 %v2021, %v2033
        %v2038 = vadd.f32 %v2022, %v2034
        %v2039 = vadd.f32 %v2023, %v2035
        %v2040 = vadd.f32 %v2024, %v2036
        %2045 = vrot.lane.b32.xlu0 %v2033, 127
        %v2046 = vpop.permute.xlu0 %2045
        %2047 = vrot.lane.b32.xlu0 %v2034, 127
        %v2048 = vpop.permute.xlu0 %2047
        %2049 = vrot.lane.b32.xlu0 %v2035, 127
        %v2050 = vpop.permute.xlu0 %2049
        %2051 = vrot.lane.b32.xlu0 %v2036, 127
        %v2052 = vpop.permute.xlu0 %2051
        %v2057 = vadd.f32 %v2037, %v2046
        %v2058 = vadd.f32 %v2038, %v2048
        %v2059 = vadd.f32 %v2039, %v2050
        %v2060 = vadd.f32 %v2040, %v2052
        %v2061 = vxor.u32 %v2057, 2147483648
        %v2062 = vxor.u32 %v2058, 2147483648
        %v2063 = vxor.u32 %v2059, 2147483648
        %v2064 = vxor.u32 %v2060, 2147483648
        %v2065 = vmul.f32 %v2061, 1.442695
        %v2066 = vpow.pop %v2065
        %v2067 = vmul.f32 %v2062, 1.442695
        %v2068 = vpow.pop %v2067
        %v2069 = vmul.f32 %v2063, 1.442695
        %v2070 = vpow.pop %v2069
        %v2071 = vmul.f32 %v2064, 1.442695
        %v2072 = vpow.pop %v2071
        %v2073 = vadd.f32 %v2066, 1.0
        %v2074 = vadd.f32 %v2068, 1.0
        %v2075 = vadd.f32 %v2070, 1.0
        %v2076 = vadd.f32 %v2072, 1.0
        %v2077 = vrcp.pop %v2073
        %v2078 = vmul.f32 1.0, %v2077
        %v2079 = vrcp.pop %v2074
        %v2080 = vmul.f32 1.0, %v2079
        %v2081 = vrcp.pop %v2075
        %v2082 = vmul.f32 1.0, %v2081
        %v2083 = vrcp.pop %v2076
        %v2084 = vmul.f32 1.0, %v2083
        %2086 = vset.pattern.permute.xlu0 0
        %2087 = vperm.xlu0 %2086, %v2078
        %v2088 = vpop.permute.xlu0 %2087
        %2091 = vset.pattern.permute.xlu0 0
        %2092 = vperm.xlu0 %2091, %v2080
        %v2093 = vpop.permute.xlu0 %2092
        %2096 = vset.pattern.permute.xlu0 0
        %2097 = vperm.xlu0 %2096, %v2082
        %v2098 = vpop.permute.xlu0 %2097
        %2101 = vset.pattern.permute.xlu0 0
        %2102 = vperm.xlu0 %2101, %v2084
        %v2103 = vpop.permute.xlu0 %2102
        %v2105 = vmul.f32 %v1909, %v2088
        %v2106 = vmul.f32 %v1910, %v2088
        %v2107 = vmul.f32 %v1911, %v2088
        %v2108 = vmul.f32 %v1912, %v2093
        %v2109 = vmul.f32 %v1913, %v2093
        %v2110 = vmul.f32 %v1914, %v2093
        %v2111 = vmul.f32 %v1915, %v2098
        %v2112 = vmul.f32 %v1916, %v2098
        %v2113 = vmul.f32 %v1917, %v2098
        %v2114 = vmul.f32 %v1918, %v2103
        %v2115 = vmul.f32 %v1919, %v2103
        %v2116 = vmul.f32 %v1920, %v2103
        %v2117 = vld [vmem:[#allocation3] sm:$0xff]
        %2130 = vrot.lane.b32.xlu0 %v2105, 17
        %v2131 = vpop.permute.xlu0 %2130
        %2132 = vrot.lane.b32.xlu0 %v2106, 17
        %v2133 = vpop.permute.xlu0 %2132
        %2134 = vrot.lane.b32.xlu0 %v2107, 17
        %v2135 = vpop.permute.xlu0 %2134
        %2136 = vrot.lane.b32.xlu0 %v2108, 17
        %v2137 = vpop.permute.xlu0 %2136
        %2138 = vrot.lane.b32.xlu0 %v2109, 17
        %v2139 = vpop.permute.xlu0 %2138
        %2140 = vrot.lane.b32.xlu0 %v2110, 17
        %v2141 = vpop.permute.xlu0 %2140
        %2142 = vrot.lane.b32.xlu0 %v2111, 17
        %v2143 = vpop.permute.xlu0 %2142
        %2144 = vrot.lane.b32.xlu0 %v2112, 17
        %v2145 = vpop.permute.xlu0 %2144
        %2146 = vrot.lane.b32.xlu0 %v2113, 17
        %v2147 = vpop.permute.xlu0 %2146
        %2148 = vrot.lane.b32.xlu0 %v2114, 17
        %v2149 = vpop.permute.xlu0 %2148
        %2150 = vrot.lane.b32.xlu0 %v2115, 17
        %v2151 = vpop.permute.xlu0 %2150
        %2152 = vrot.lane.b32.xlu0 %v2116, 17
        %v2153 = vpop.permute.xlu0 %2152
        %v2154 = vsel %vm1679, %v2131, %v2133
        %v2155 = vsel %vm1679, %v2133, %v2135
        %v2156 = vsel %vm1679, %v2137, %v2139
        %v2157 = vsel %vm1679, %v2139, %v2141
        %v2158 = vsel %vm1679, %v2143, %v2145
        %v2159 = vsel %vm1679, %v2145, %v2147
        %v2160 = vsel %vm1679, %v2149, %v2151
        %v2161 = vsel %vm1679, %v2151, %v2153
        %vm2170 = vcmask 261120
        %v2172 = vsel %vm2170, %v2117, 0
        %2174 = vmatprep.subr.mxu0 0.0
        %2175 = vmatpush1.msra.mxu0 0.0
        %2176 = vmatprep.subr.mxu0 0.0
        %2177 = vmatpush1.msra.mxu0 0.0
        %2178 = vmatprep.subr.mxu0 0.0
        %2179 = vmatpush1.msra.mxu0 0.0
        %2180 = vmatprep.subr.mxu0 0.0
        %2181 = vmatpush1.msra.mxu0 0.0
        %2182 = vmatprep.subr.mxu0 0.0
        %2183 = vmatpush1.msra.mxu0 0.0
        %2184 = vmatprep.subr.mxu0 0.0
        %2185 = vmatpush1.msra.mxu0 0.0
        %2186 = vmatprep.subr.mxu0 0.0
        %2187 = vmatpush1.msra.mxu0 0.0
        %2188 = vmatprep.subr.mxu0 0.0
        %2189 = vmatpush1.msra.mxu0 0.0
        %2190 = vmatprep.subr.mxu0 0.0
        %2191 = vmatpush1.msra.mxu0 0.0
        %2192 = vmatprep.subr.mxu0 0.0
        %2193 = vmatpush1.msra.mxu0 0.0
        %2194 = vmatprep.subr.mxu0 0.0
        %2195 = vmatpush1.msra.mxu0 0.0
        %2196 = vmatprep.subr.mxu0 0.0
        %2197 = vmatpush1.msra.mxu0 0.0
        %2198 = vmatprep.subr.mxu0 %v2161
        %2199 = vmatpush1.msra.mxu0 %v2160
        %2200 = vmatprep.subr.mxu0 %v2159
        %2201 = vmatpush1.msra.mxu0 %v2158
        %2202 = vmatprep.subr.mxu0 %v2157
        %2203 = vmatpush1.msra.mxu0 %v2156
        %2204 = vmatprep.subr.mxu0 %v2155
        %2205 = vmatpush1.msra.mxu0 %v2154
        %2206 = vmatprep.subr.mxu0 0.0
        %2207 = vmatpush2.msra.mxu0 0.0
        %2208 = vmatprep.subr.mxu0 0.0
        %2209 = vmatpush2.msra.mxu0 0.0
        %2210 = vmatprep.subr.mxu0 0.0
        %2211 = vmatpush2.msra.mxu0 0.0
        %2212 = vmatprep.subr.mxu0 0.0
        %2213 = vmatpush2.msra.mxu0 0.0
        %2214 = vmatprep.subr.mxu0 0.0
        %2215 = vmatpush2.msra.mxu0 0.0
        %2216 = vmatprep.subr.mxu0 0.0
        %2217 = vmatpush2.msra.mxu0 0.0
        %2218 = vmatprep.subr.mxu0 0.0
        %2219 = vmatpush2.msra.mxu0 0.0
        %2220 = vmatprep.subr.mxu0 0.0
        %2221 = vmatpush2.msra.mxu0 0.0
        %2222 = vmatprep.subr.mxu0 0.0
        %2223 = vmatpush2.msra.mxu0 0.0
        %2224 = vmatprep.subr.mxu0 0.0
        %2225 = vmatpush2.msra.mxu0 0.0
        %2226 = vmatprep.subr.mxu0 0.0
        %2227 = vmatpush2.msra.mxu0 0.0
        %2228 = vmatprep.subr.mxu0 0.0
        %2229 = vmatpush2.msra.mxu0 0.0
        %2230 = vmatprep.subr.mxu0 0.0
        %2231 = vmatpush2.msra.mxu0 0.0
        %2232 = vmatprep.subr.mxu0 0.0
        %2233 = vmatpush2.msra.mxu0 0.0
        %2234 = vmatprep.subr.mxu0 0.0
        %2235 = vmatpush2.msra.mxu0 0.0
        %2236 = vmatprep.subr.mxu0 0.0
        %2237 = vmatpush2.msra.mxu0 0.0
        %2238 = vmatprep.mubr.f32.mxu0 0.0
        %2239 = vmatmul.mubr.f32.gmra.mxu0 %v2172
        %v2240 = vpop.f32.mrf.mxu0
        %v2241 = vadd.f32 0.0, %v2240
        %v2242 = vpop.f32.mrf.mxu0
        %v2243 = vadd.f32 0.0, %v2242
        %2244 = vdwg.mxu0
        %v2245 = vld [vmem:[#allocation5] sm:$0xff]
        %2247 = vset.pattern.permute.xlu0 0
        %2248 = vperm.xlu0 %2247, %v2245
        %v2249 = vpop.permute.xlu0 %2248
        %v2251 = vmul.f32 %v2241, %v2249
        %v2252 = vmul.f32 %v2243, %v2249
        %v2253 = vld [vmem:[#allocation7] sm:$0xff]
        %2255 = vset.pattern.permute.xlu0 0
        %2256 = vperm.xlu0 %2255, %v2253
        %v2257 = vpop.permute.xlu0 %2256
        %v2259 = vadd.f32 %v2251, %v2257
        %v2260 = vadd.f32 %v2252, %v2257
        %v2261 = vadd.f32 %v2259, %v506
        %v2262 = vadd.f32 %v2260, %v507
        %2263 = vst [vmem:[%s505] sm:$0xff] %v2261
        %2264 = vst [vmem:[%s505 + $0x8] sm:$0xff] %v2262
        %p2265 = scmp.lt.s32.totalorder %s27, 1
        %s2266 = scalar_select %p2265, %s27, 1
        %s2267 = smul.addr %s2266, 2
        %s2268 = smul.addr %s2267, 8
        %s2269 = scalar_lea.vmem %s14, %s2268
        // Predicated region
        $region89: #{_lambda_.1} parent=75 // pred_check
          %p2270 = pneg %p344
        $region90: #{_lambda_.1} parent=75 // pred_check_branch
          %2272 = sbr.rel (%p2270) target = $region92
        $region91: #{_lambda_.1} parent=75 // pred_region
          _
        $region92: #{_lambda_.1} parent=75 // pred_fallthru
          _
      $region76: #{_lambda_.1} parent=5 // pred_fallthru
        _
      %p2273 = scmp.le.s32.totalorder 2, %s22
      // Predicated region
      $region93: #{_lambda_.1} parent=5 // pred_check
        %p2274 = pneg %p2273
      $region94: #{_lambda_.1} parent=5 // pred_check_branch
        %2276 = sbr.rel (%p2274) target = $region96
      $region95: #{_lambda_.1} parent=5 // pred_region
        %s2277 = ssub.s32 %s22, 2
        // Predicated region
        $region97: #{_lambda_.1} parent=95 // pred_check
          %p2278 = pneg %p350
        $region98: #{_lambda_.1} parent=95 // pred_check_branch
          %2280 = sbr.rel (%p2278) target = $region100
        $region99: #{_lambda_.1} parent=95 // pred_region
          %p2281 = scmp.lt.s32.totalorder %s28, 1
          %s2282 = scalar_select %p2281, %s28, 1
          %s2283 = smul.addr %s2282, 2
          %s2284 = smul.addr %s2283, 8
          %s2285 = scalar_lea.vmem %s14, %s2284
        $region100: #{_lambda_.1} parent=95 // pred_fallthru
          _
      $region96: #{_lambda_.1} parent=5 // pred_fallthru
        _
    $region6: #{_lambda_.1} parent=1 // loop_footer
      %s26 = sadd.s32 1, %s22
    $region7: #{_lambda_.1} parent=1 // loop_footer_branch
      %21 = sbr.rel target = $region3
    $region8: #{_lambda_.1} parent=1 // loop_exit
      _
    %2286 = vsyncpa [#allocation4], 1
    %s2287 = scalar_lea.sflag [#allocation4], 1
    %2288 = vsyncpa %s2287, 1
    %2289 = vsyncpa [#allocation6], 1

</llo_original>
